<compile_context>
chip_gen: v6e
topology: v6e:2x2x1
jax: 0.10.0
libtpu: 0.0.40
codegen_flags: <defaults>
</compile_context>

<pallas_src>
import math
from functools import partial

import numpy as np
import jax
import jax.numpy as jnp
from jax import lax
from jax.experimental import pallas as pl
from jax.experimental.pallas import tpu as pltpu


def _round_up(x, m):
    return (x + m - 1) // m * m


def _fft_proj_kernel(x_ref, w_ref, wp_ref, b_ref, o_ref, m_ref, zf_ref, a_scr, *,
                     pad, ppf, n_rows, mask_rows, wp_resident):
    """DFT matmul + log-magnitude + masked bf16 projection, accumulated over C."""
    c = pl.program_id(1)

    @pl.when(c == 0)
    def _init():
        a_scr[...] = jnp.zeros_like(a_scr)
        m_ref[...] = jnp.full_like(m_ref, -jnp.inf)
        zf_ref[...] = jnp.zeros_like(zf_ref)

    x = x_ref[0]                                                     # (TM, P*P) f32
    # One fused f32 MXU matmul: cols [0,pad) = cos half, [pad,2*pad) = sin half.
    y = jnp.dot(x, w_ref[...], preferred_element_type=jnp.float32)  # (TM, 2*pad)
    re = y[:, :pad]                                                  # lane-aligned
    im = y[:, pad:]
    mag2 = re * re + im * im
    # 0.5*log(re^2+im^2) == log(|rfft2|) with one fewer EUP transcendental.
    logmag = 0.5 * jnp.log(mag2)            # -inf at exact zeros / padded cols
    inf_mask = jnp.isinf(logmag)            # +/-inf, same set torch.isinf flags
    masked = jnp.where(inf_mask, 0.0, logmag)

    wp = wp_ref[c] if wp_resident else wp_ref[0]         # (pad, E_pad) bf16
    # Projection in bf16; mask / -inf logic is decided in f32 above.
    a_scr[...] += jnp.dot(masked.astype(jnp.bfloat16), wp,
                          preferred_element_type=jnp.float32)
    # Per-row-block running max; -inf from padded rows/cols never wins,
    # matching the reference's `patches.max()`.
    m_ref[...] = jnp.maximum(m_ref[...], jnp.max(logmag))

    # Flag whether any *valid* (non-padded) entry hit an exact zero; padding
    # columns (>= ppf) and padded rows are always -inf and must be excluded so
    # the rare fixup path is not triggered spuriously.
    tm = a_scr.shape[0]
    valid = lax.broadcasted_iota(jnp.int32, (tm, pad), 1) < ppf
    if mask_rows:  # only the last row block can contain zero-padded rows
        row_ids = pl.program_id(0) * tm + lax.broadcasted_iota(jnp.int32, (tm, pad), 0)
        valid = jnp.logical_and(valid, row_ids < n_rows)
    zhit = jnp.where(jnp.logical_and(inf_mask, valid), 1.0, 0.0)
    zf_ref[...] = jnp.maximum(zf_ref[...], jnp.max(zhit))

    @pl.when(c == pl.num_programs(1) - 1)
    def _epilogue():
        # Common case (no +/-inf anywhere): the isinf fixup is a no-op, so
        # |A + bias| is already the final answer -> no second pass over (R, E).
        o_ref[...] = jnp.abs(a_scr[...] + b_ref[...])


def _fixup_recompute_kernel(gmax_ref, x_ref, w_ref, wp_ref, b_ref, o_ref,
                            a_scr, s_scr, *, pad, wp_resident):
    """Rare path: some |rfft2| entry was exactly 0 (or inf).  Recompute the
    projection with the `patches[isinf] = patches.max()` substitution folded in
    as  |A + gmax*S + bias|."""
    c = pl.program_id(1)

    @pl.when(c == 0)
    def _init():
        a_scr[...] = jnp.zeros_like(a_scr)
        s_scr[...] = jnp.zeros_like(s_scr)

    x = x_ref[0]
    y = jnp.dot(x, w_ref[...], preferred_element_type=jnp.float32)
    re = y[:, :pad]
    im = y[:, pad:]
    logmag = 0.5 * jnp.log(re * re + im * im)
    inf_mask = jnp.isinf(logmag)
    masked = jnp.where(inf_mask, 0.0, logmag)
    zmaskf = jnp.where(inf_mask, 1.0, 0.0)   # padded cols harmless: wp rows are 0

    wp = wp_ref[c] if wp_resident else wp_ref[0]
    a_scr[...] += jnp.dot(masked.astype(jnp.bfloat16), wp,
                          preferred_element_type=jnp.float32)
    s_scr[...] += jnp.dot(zmaskf.astype(jnp.bfloat16), wp,
                          preferred_element_type=jnp.float32)

    @pl.when(c == pl.num_programs(1) - 1)
    def _epilogue():
        g = gmax_ref[0, 0]
        o_ref[...] = jnp.abs(a_scr[...] + g * s_scr[...] + b_ref[...])


def fft_patch_embed(x, proj_w, proj_b, patch_size):
    """x: (B, C, H, W) float -> (B, embed_dim, H//P, W//P), matching FFTPatchEmbed."""
    B, C, H, W = x.shape
    P = patch_size
    PF = P // 2 + 1
    nP = H // P
    E = proj_w.shape[0]
    K_pix = P * P
    PPF = P * PF
    PAD = _round_up(PPF, 128)        # lane-dense fourier width per channel
    E_pad = _round_up(E, 128)        # lane-dense embedding width

    # ---- fused [cos | sin] DFT matrix for rfft2(norm='forward'), zero-padded ----
    m = np.repeat(np.arange(P), P)   # pixel row index -> m
    n = np.tile(np.arange(P), P)     # pixel row index -> n
    k = np.repeat(np.arange(P), PF)  # freq  col index -> k
    l = np.tile(np.arange(PF), P)    # freq  col index -> l
    phase = (-2.0 * np.pi / P) * (np.outer(m, k) + np.outer(n, l))
    w_fused = np.zeros((K_pix, 2 * PAD), np.float32)
    w_fused[:, :PPF] = np.cos(phase) / (P * P)
    w_fused[:, PAD:PAD + PPF] = np.sin(phase) / (P * P)
    w_fused = jnp.asarray(w_fused)

    # ---- per-channel projection blocks (bf16), zero-padded to (PAD, E_pad) ------
    # proj_w: (E, C*P*PF), feature order (c, k, l) -> (C, PPF, E) -> (C, PAD, E_pad)
    wt = proj_w.astype(jnp.float32).T.reshape(C, PPF, E)
    wpc = jnp.pad(wt, ((0, 0), (0, PAD - PPF), (0, E_pad - E))).astype(jnp.bfloat16)
    bias = jnp.pad(proj_b.astype(jnp.float32), (0, E_pad - E)).reshape(1, E_pad)

    # Keep all projection weights VMEM-resident (fetched once per call) unless
    # C*E is so large they would crowd out the working set.
    wp_resident = (C * PAD * E_pad * 2) <= (8 << 20)

    # ---- row layout: (C, B*nP*nP, P*P), rows padded to a tile multiple ----------
    # TODO(synk): verify the patchify transpose fuses into the pallas_call input
    # (allow_input_fusion); otherwise express it via a BlockSpec over the 6-D
    # (B,C,nP,P,nP,P) view with an in-kernel axis swap.
    R = B * nP * nP
    x_rows = x.astype(jnp.float32).reshape(B, C, nP, P, nP, P)
    x_rows = x_rows.transpose(1, 0, 2, 4, 3, 5).reshape(C, R, K_pix)

    # Row tile: big enough to amortize the ~0.35us/step overhead, small enough
    # that the "parallel" row axis keeps >= ~4 blocks (both v7x TensorCores).
    TM = min(512, max(8, _round_up(-(-R // 4), 8)))
    Rp = _round_up(R, TM)
    if Rp != R:
        x_rows = jnp.pad(x_rows, ((0, 0), (0, Rp - R), (0, 0)))
    num_blk = Rp // TM

    if wp_resident:
        wp_spec = pl.BlockSpec((C, PAD, E_pad), lambda i, c: (0, 0, 0))
    else:
        wp_spec = pl.BlockSpec((1, PAD, E_pad), lambda i, c: (c, 0, 0))
    x_spec = pl.BlockSpec((1, TM, K_pix), lambda i, c: (c, i, 0))
    dft_spec = pl.BlockSpec((K_pix, 2 * PAD), lambda i, c: (0, 0))
    bias_spec = pl.BlockSpec((1, E_pad), lambda i, c: (0, 0))
    row_out_spec = pl.BlockSpec((TM, E_pad), lambda i, c: (i, 0))
    tile_spec = pl.BlockSpec((1, 8, 128), lambda i, c: (i, 0, 0))

    # ---- kernel 1: DFT + log|.| + masked projection; common-case output --------
    out_common, max_tiles, zflags = pl.pallas_call(
        partial(_fft_proj_kernel, pad=PAD, ppf=PPF, n_rows=R,
                mask_rows=(Rp != R), wp_resident=wp_resident),
        out_shape=(jax.ShapeDtypeStruct((Rp, E_pad), jnp.float32),
                   jax.ShapeDtypeStruct((num_blk, 8, 128), jnp.float32),
                   jax.ShapeDtypeStruct((num_blk, 8, 128), jnp.float32)),
        grid=(num_blk, C),
        in_specs=[x_spec, dft_spec, wp_spec, bias_spec],
        out_specs=(row_out_spec, tile_spec, tile_spec),
        scratch_shapes=[pltpu.VMEM((TM, E_pad), jnp.float32)],
        compiler_params=pltpu.CompilerParams(
            dimension_semantics=("parallel", "arbitrary"),
            allow_input_fusion=[True, False, False, False]),
    )(x_rows, w_fused, wpc, bias)

    # Global max of the log-magnitudes (reference: patches.max()) -- tiny reduce.
    gmax = jnp.max(max_tiles).reshape(1, 1)
    any_zero = jnp.max(zflags) > 0.0

    # ---- rare path: recompute with the isinf -> global-max fixup folded in -----
    def _rare(g, xr, wf, wp, b, oc):
        return pl.pallas_call(
            partial(_fixup_recompute_kernel, pad=PAD, wp_resident=wp_resident),
            out_shape=jax.ShapeDtypeStruct((Rp, E_pad), jnp.float32),
            grid=(num_blk, C),
            in_specs=[pl.BlockSpec(memory_space=pltpu.MemorySpace.SMEM),  # gmax
                      x_spec, dft_spec, wp_spec, bias_spec],
            out_specs=row_out_spec,
            scratch_shapes=[pltpu.VMEM((TM, E_pad), jnp.float32),
                            pltpu.VMEM((TM, E_pad), jnp.float32)],
            compiler_params=pltpu.CompilerParams(
                dimension_semantics=("parallel", "arbitrary")),
        )(g, xr, wf, wp, b)

    def _common(g, xr, wf, wp, b, oc):
        return oc

    proj = lax.cond(any_zero, _rare, _common,
                    gmax, x_rows, w_fused, wpc, bias, out_common)

    # ---- back to (B, embed_dim, nP, nP) -----------------------------------------
    proj = proj[:R, :E].reshape(B, nP, nP, E)
    return proj.transpose(0, 3, 1, 2)


if __name__ == "__main__":
    key = jax.random.PRNGKey(0)
    B, C, IMG, P, E = 2, 4, 16, 8, 32        # small shapes consistent with the module
    PF = P // 2 + 1
    nP = IMG // P
    fan_in = C * P * PF

    k_x, k_w, k_b = jax.random.split(key, 3)
    x = jax.random.normal(k_x, (B, C, IMG, IMG), dtype=jnp.float32)
    # nn.init.normal_(proj.weight, 0, 0.0001); bias keeps torch's default
    # U(-1/sqrt(fan_in), 1/sqrt(fan_in)).
    proj_w = 1e-4 * jax.random.normal(k_w, (E, fan_in), dtype=jnp.float32)
    bound = 1.0 / math.sqrt(fan_in)
    proj_b = jax.random.uniform(k_b, (E,), minval=-bound, maxval=bound,
                                dtype=jnp.float32)

    fn = jax.jit(fft_patch_embed, static_argnums=3)
    out = jax.block_until_ready(fn(x, proj_w, proj_b, P))
    assert out.shape == (B, E, nP, nP), out.shape
    print("KERNEL_OK")
</pallas_src>

<mosaic_0001>
module attributes {stable_mosaic.version = 11 : i64} {
  func.func @_fft_proj_kernel(%arg0: i32, %arg1: i32, %arg2: memref<1x8x64xf32, #tpu.memory_space<vmem>>, %arg3: memref<64x256xf32, #tpu.memory_space<vmem>>, %arg4: memref<4x128x128xbf16, #tpu.memory_space<vmem>>, %arg5: memref<1x128xf32, #tpu.memory_space<vmem>>, %arg6: memref<8x128xf32, #tpu.memory_space<vmem>>, %arg7: memref<1x8x128xf32, #tpu.memory_space<vmem>>, %arg8: memref<1x8x128xf32, #tpu.memory_space<vmem>>, %arg9: memref<8x128xf32, #tpu.memory_space<vmem>>) attributes {dimension_semantics = [#tpu.dimension_semantics<parallel>, #tpu.dimension_semantics<arbitrary>], iteration_bounds = array<i64: 1, 4>, scalar_prefetch = 0 : i64, scratch_operands = 1 : i64, tpu.core_type = #tpu.core_type<tc>, window_params = [{transform_indices = @transform_0, window_bounds = array<i64: 1, 8, 64>}, {pipeline_mode = #tpu.pipeline_mode<synchronous>, transform_indices = @transform_1, window_bounds = array<i64: 64, 256>}, {pipeline_mode = #tpu.pipeline_mode<synchronous>, transform_indices = @transform_2, window_bounds = array<i64: 4, 128, 128>}, {pipeline_mode = #tpu.pipeline_mode<synchronous>, transform_indices = @transform_3, window_bounds = array<i64: 1, 128>}, {transform_indices = @transform_4, window_bounds = array<i64: 8, 128>}, {transform_indices = @transform_5, window_bounds = array<i64: 1, 8, 128>}, {transform_indices = @transform_6, window_bounds = array<i64: 1, 8, 128>}]} {
    %c0_i32 = arith.constant 0 : i32
    %0 = arith.cmpi eq, %arg1, %c0_i32 : i32
    %1 = arith.extui %0 : i1 to i32
    %c0_i32_0 = arith.constant 0 : i32
    %2 = arith.cmpi ne, %1, %c0_i32_0 : i32
    scf.if %2 {
      %cst_32 = arith.constant 0.000000e+00 : f32
      %54 = vector.broadcast %cst_32 : f32 to vector<8x128xf32>
      %c0_33 = arith.constant 0 : index
      %c0_34 = arith.constant 0 : index
      %55 = vector.load %arg9[%c0_33, %c0_34] : memref<8x128xf32, #tpu.memory_space<vmem>>, vector<8x128xf32>
      tpu.vector_store %arg9[%c0_33, %c0_34], %54 {strides = array<i32>} : memref<8x128xf32, #tpu.memory_space<vmem>>, vector<8x128xf32>,
      %cst_35 = arith.constant 0xFF800000 : f32
      %56 = vector.broadcast %cst_35 : f32 to vector<1x8x128xf32>
      %c0_36 = arith.constant 0 : index
      %c0_37 = arith.constant 0 : index
      %c0_38 = arith.constant 0 : index
      %57 = vector.load %arg7[%c0_36, %c0_37, %c0_38] : memref<1x8x128xf32, #tpu.memory_space<vmem>>, vector<1x8x128xf32>
      tpu.vector_store %arg7[%c0_36, %c0_37, %c0_38], %56 {strides = array<i32>} : memref<1x8x128xf32, #tpu.memory_space<vmem>>, vector<1x8x128xf32>,
      %cst_39 = arith.constant 0.000000e+00 : f32
      %58 = vector.broadcast %cst_39 : f32 to vector<1x8x128xf32>
      %c0_40 = arith.constant 0 : index
      %c0_41 = arith.constant 0 : index
      %c0_42 = arith.constant 0 : index
      %59 = vector.load %arg8[%c0_40, %c0_41, %c0_42] : memref<1x8x128xf32, #tpu.memory_space<vmem>>, vector<1x8x128xf32>
      tpu.vector_store %arg8[%c0_40, %c0_41, %c0_42], %58 {strides = array<i32>} : memref<1x8x128xf32, #tpu.memory_space<vmem>>, vector<1x8x128xf32>,
    } else {
    }
    %c0 = arith.constant 0 : index
    %c0_1 = arith.constant 0 : index
    %c0_2 = arith.constant 0 : index
    %3 = vector.load %arg2[%c0, %c0_1, %c0_2] : memref<1x8x64xf32, #tpu.memory_space<vmem>>, vector<1x8x64xf32>
    %4 = vector.shape_cast %3 : vector<1x8x64xf32> to vector<8x64xf32>
    %c0_3 = arith.constant 0 : index
    %c0_4 = arith.constant 0 : index
    %5 = vector.load %arg3[%c0_3, %c0_4] : memref<64x256xf32, #tpu.memory_space<vmem>>, vector<64x256xf32>
    %cst = arith.constant dense<0.000000e+00> : vector<8x256xf32>
    %6 = tpu.matmul %4, %5, %cst {dimension_numbers = #tpu.dot_dimension_numbers<[1], [0], [0], [1], [0, 0, 1, 1], [], []>} : vector<8x64xf32>, vector<64x256xf32>, vector<8x256xf32> -> vector<8x256xf32>
    %7 = vector.extract_strided_slice %6 {offsets = [0, 0], sizes = [8, 128], strides = [1, 1]} : vector<8x256xf32> to vector<8x128xf32>
    %8 = vector.extract_strided_slice %6 {offsets = [0, 128], sizes = [8, 128], strides = [1, 1]} : vector<8x256xf32> to vector<8x128xf32>
    %9 = arith.mulf %7, %7 : vector<8x128xf32>
    %10 = arith.mulf %8, %8 : vector<8x128xf32>
    %11 = arith.addf %9, %10 : vector<8x128xf32>
    %12 = math.log %11 : vector<8x128xf32>
    %cst_5 = arith.constant 5.000000e-01 : f32
    %13 = vector.broadcast %cst_5 : f32 to vector<8x128xf32>
    %14 = arith.mulf %13, %12 : vector<8x128xf32>
    %15 = math.absf %14 : vector<8x128xf32>
    %cst_6 = arith.constant 0x7F800000 : f32
    %16 = vector.broadcast %cst_6 : f32 to vector<8x128xf32>
    %17 = arith.cmpf oeq, %15, %16 : vector<8x128xf32>
    %cst_7 = arith.constant 0.000000e+00 : f32
    %18 = vector.broadcast %cst_7 : f32 to vector<8x128xf32>
    %19 = arith.select %17, %18, %14 : vector<8x128xi1>, vector<8x128xf32>
    %20 = arith.index_cast %arg1 : i32 to index
    %c0_8 = arith.constant 0 : index
    %c0_9 = arith.constant 0 : index
    %21 = vector.load %arg4[%20, %c0_8, %c0_9] : memref<4x128x128xbf16, #tpu.memory_space<vmem>>, vector<1x128x128xbf16>
    %22 = vector.shape_cast %21 : vector<1x128x128xbf16> to vector<128x128xbf16>
    %c0_10 = arith.constant 0 : index
    %c0_11 = arith.constant 0 : index
    %23 = vector.load %arg9[%c0_10, %c0_11] : memref<8x128xf32, #tpu.memory_space<vmem>>, vector<8x128xf32>
    %24 = arith.truncf %19 : vector<8x128xf32> to vector<8x128xbf16>
    %cst_12 = arith.constant dense<0.000000e+00> : vector<8x128xf32>
    %25 = tpu.matmul %24, %22, %cst_12 {dimension_numbers = #tpu.dot_dimension_numbers<[1], [0], [0], [1], [0, 0, 1, 1], [], []>} : vector<8x128xbf16>, vector<128x128xbf16>, vector<8x128xf32> -> vector<8x128xf32>
    %26 = arith.addf %23, %25 : vector<8x128xf32>
    %c0_13 = arith.constant 0 : index
    %c0_14 = arith.constant 0 : index
    %27 = vector.load %arg9[%c0_13, %c0_14] : memref<8x128xf32, #tpu.memory_space<vmem>>, vector<8x128xf32>
    tpu.vector_store %arg9[%c0_13, %c0_14], %26 {strides = array<i32>} : memref<8x128xf32, #tpu.memory_space<vmem>>, vector<8x128xf32>,
    %c0_15 = arith.constant 0 : index
    %c0_16 = arith.constant 0 : index
    %c0_17 = arith.constant 0 : index
    %28 = vector.load %arg7[%c0_15, %c0_16, %c0_17] : memref<1x8x128xf32, #tpu.memory_space<vmem>>, vector<1x8x128xf32>
    %29 = vector.shape_cast %14 : vector<8x128xf32> to vector<1x8x128xf32>
    %cst_18 = arith.constant dense<0xFF800000> : vector<1xf32>
    %30 = vector.multi_reduction <maximumf>, %29, %cst_18 [1, 2] : vector<1x8x128xf32> to vector<1xf32>
    %31 = vector.shape_cast %30 : vector<1xf32> to vector<1x1x1xf32>
    %32 = vector.extract %31[0, 0, 0] : f32 from vector<1x1x1xf32>
    %33 = vector.broadcast %32 : f32 to vector<1x8x128xf32>
    %34 = arith.maximumf %28, %33 : vector<1x8x128xf32>
    %c0_19 = arith.constant 0 : index
    %c0_20 = arith.constant 0 : index
    %c0_21 = arith.constant 0 : index
    %35 = vector.load %arg7[%c0_19, %c0_20, %c0_21] : memref<1x8x128xf32, #tpu.memory_space<vmem>>, vector<1x8x128xf32>
    tpu.vector_store %arg7[%c0_19, %c0_20, %c0_21], %34 {strides = array<i32>} : memref<1x8x128xf32, #tpu.memory_space<vmem>>, vector<1x8x128xf32>,
    %36 = tpu.iota {dimensions = array<i32: 1>} : vector<8x128xi32>
    %c40_i32 = arith.constant 40 : i32
    %37 = vector.broadcast %c40_i32 : i32 to vector<8x128xi32>
    %38 = arith.cmpi slt, %36, %37 : vector<8x128xi32>
    %39 = arith.andi %17, %38 : vector<8x128xi1>
    %cst_22 = arith.constant 1.000000e+00 : f32
    %cst_23 = arith.constant 0.000000e+00 : f32
    %40 = vector.broadcast %cst_22 : f32 to vector<8x128xf32>
    %41 = vector.broadcast %cst_23 : f32 to vector<8x128xf32>
    %42 = arith.select %39, %40, %41 : vector<8x128xi1>, vector<8x128xf32>
    %c0_24 = arith.constant 0 : index
    %c0_25 = arith.constant 0 : index
    %c0_26 = arith.constant 0 : index
    %43 = vector.load %arg8[%c0_24, %c0_25, %c0_26] : memref<1x8x128xf32, #tpu.memory_space<vmem>>, vector<1x8x128xf32>
    %44 = vector.shape_cast %42 : vector<8x128xf32> to vector<1x8x128xf32>
    %cst_27 = arith.constant dense<0xFF800000> : vector<1xf32>
    %45 = vector.multi_reduction <maximumf>, %44, %cst_27 [1, 2] : vector<1x8x128xf32> to vector<1xf32>
    %46 = vector.shape_cast %45 : vector<1xf32> to vector<1x1x1xf32>
    %47 = vector.extract %46[0, 0, 0] : f32 from vector<1x1x1xf32>
    %48 = vector.broadcast %47 : f32 to vector<1x8x128xf32>
    %49 = arith.maximumf %43, %48 : vector<1x8x128xf32>
    %c0_28 = arith.constant 0 : index
    %c0_29 = arith.constant 0 : index
    %c0_30 = arith.constant 0 : index
    %50 = vector.load %arg8[%c0_28, %c0_29, %c0_30] : memref<1x8x128xf32, #tpu.memory_space<vmem>>, vector<1x8x128xf32>
    tpu.vector_store %arg8[%c0_28, %c0_29, %c0_30], %49 {strides = array<i32>} : memref<1x8x128xf32, #tpu.memory_space<vmem>>, vector<1x8x128xf32>,
    %c3_i32 = arith.constant 3 : i32
    %51 = arith.cmpi eq, %arg1, %c3_i32 : i32
    %52 = arith.extui %51 : i1 to i32
    %c0_i32_31 = arith.constant 0 : i32
    %53 = arith.cmpi ne, %52, %c0_i32_31 : i32
    scf.if %53 {
      %c0_32 = arith.constant 0 : index
      %c0_33 = arith.constant 0 : index
      %54 = vector.load %arg9[%c0_32, %c0_33] : memref<8x128xf32, #tpu.memory_space<vmem>>, vector<8x128xf32>
      %c0_34 = arith.constant 0 : index
      %c0_35 = arith.constant 0 : index
      %55 = vector.load %arg5[%c0_34, %c0_35] : memref<1x128xf32, #tpu.memory_space<vmem>>, vector<1x128xf32>
      %56 = vector.broadcast %55 : vector<1x128xf32> to vector<8x128xf32>
      %57 = arith.addf %54, %56 : vector<8x128xf32>
      %58 = math.absf %57 : vector<8x128xf32>
      %c0_36 = arith.constant 0 : index
      %c0_37 = arith.constant 0 : index
      %59 = vector.load %arg6[%c0_36, %c0_37] : memref<8x128xf32, #tpu.memory_space<vmem>>, vector<8x128xf32>
      tpu.vector_store %arg6[%c0_36, %c0_37], %58 {strides = array<i32>} : memref<8x128xf32, #tpu.memory_space<vmem>>, vector<8x128xf32>,
    } else {
    }
    return
  }
  func.func @transform_0(%arg0: i32, %arg1: i32) -> (i32, i32, i32) {
    %c0_i32 = arith.constant 0 : i32
    %c0_i32_0 = arith.constant 0 : i32
    return %arg1, %arg0, %c0_i32 : i32, i32, i32
  }
  func.func @transform_1(%arg0: i32, %arg1: i32) -> (i32, i32) {
    %c0_i32 = arith.constant 0 : i32
    %c0_i32_0 = arith.constant 0 : i32
    %c0_i32_1 = arith.constant 0 : i32
    return %c0_i32, %c0_i32_0 : i32, i32
  }
  func.func @transform_2(%arg0: i32, %arg1: i32) -> (i32, i32, i32) {
    %c0_i32 = arith.constant 0 : i32
    %c0_i32_0 = arith.constant 0 : i32
    %c0_i32_1 = arith.constant 0 : i32
    %c0_i32_2 = arith.constant 0 : i32
    return %c0_i32, %c0_i32_0, %c0_i32_1 : i32, i32, i32
  }
  func.func @transform_3(%arg0: i32, %arg1: i32) -> (i32, i32) {
    %c0_i32 = arith.constant 0 : i32
    %c0_i32_0 = arith.constant 0 : i32
    %c0_i32_1 = arith.constant 0 : i32
    return %c0_i32, %c0_i32_0 : i32, i32
  }
  func.func @transform_4(%arg0: i32, %arg1: i32) -> (i32, i32) {
    %c0_i32 = arith.constant 0 : i32
    %c0_i32_0 = arith.constant 0 : i32
    return %arg0, %c0_i32 : i32, i32
  }
  func.func @transform_5(%arg0: i32, %arg1: i32) -> (i32, i32, i32) {
    %c0_i32 = arith.constant 0 : i32
    %c0_i32_0 = arith.constant 0 : i32
    %c0_i32_1 = arith.constant 0 : i32
    return %arg0, %c0_i32, %c0_i32_0 : i32, i32, i32
  }
  func.func @transform_6(%arg0: i32, %arg1: i32) -> (i32, i32, i32) {
    %c0_i32 = arith.constant 0 : i32
    %c0_i32_0 = arith.constant 0 : i32
    %c0_i32_1 = arith.constant 0 : i32
    return %arg0, %c0_i32, %c0_i32_0 : i32, i32, i32
  }
}

module attributes {stable_mosaic.version = 11 : i64} {
  func.func @_fixup_recompute_kernel(%arg0: i32, %arg1: i32, %arg2: memref<1x1xf32, #tpu.memory_space<smem>>, %arg3: memref<1x8x64xf32, #tpu.memory_space<vmem>>, %arg4: memref<64x256xf32, #tpu.memory_space<vmem>>, %arg5: memref<4x128x128xbf16, #tpu.memory_space<vmem>>, %arg6: memref<1x128xf32, #tpu.memory_space<vmem>>, %arg7: memref<8x128xf32, #tpu.memory_space<vmem>>, %arg8: memref<8x128xf32, #tpu.memory_space<vmem>>, %arg9: memref<8x128xf32, #tpu.memory_space<vmem>>) attributes {dimension_semantics = [#tpu.dimension_semantics<parallel>, #tpu.dimension_semantics<arbitrary>], iteration_bounds = array<i64: 1, 4>, scalar_prefetch = 0 : i64, scratch_operands = 2 : i64, tpu.core_type = #tpu.core_type<tc>, window_params = [{transform_indices = @transform_0, window_bounds = array<i64: 1, 1>}, {transform_indices = @transform_1, window_bounds = array<i64: 1, 8, 64>}, {pipeline_mode = #tpu.pipeline_mode<synchronous>, transform_indices = @transform_2, window_bounds = array<i64: 64, 256>}, {pipeline_mode = #tpu.pipeline_mode<synchronous>, transform_indices = @transform_3, window_bounds = array<i64: 4, 128, 128>}, {pipeline_mode = #tpu.pipeline_mode<synchronous>, transform_indices = @transform_4, window_bounds = array<i64: 1, 128>}, {transform_indices = @transform_5, window_bounds = array<i64: 8, 128>}]} {
    %c0_i32 = arith.constant 0 : i32
    %0 = arith.cmpi eq, %arg1, %c0_i32 : i32
    %1 = arith.extui %0 : i1 to i32
    %c0_i32_0 = arith.constant 0 : i32
    %2 = arith.cmpi ne, %1, %c0_i32_0 : i32
    scf.if %2 {
      %cst_23 = arith.constant 0.000000e+00 : f32
      %39 = vector.broadcast %cst_23 : f32 to vector<8x128xf32>
      %c0_24 = arith.constant 0 : index
      %c0_25 = arith.constant 0 : index
      %40 = vector.load %arg8[%c0_24, %c0_25] : memref<8x128xf32, #tpu.memory_space<vmem>>, vector<8x128xf32>
      tpu.vector_store %arg8[%c0_24, %c0_25], %39 {strides = array<i32>} : memref<8x128xf32, #tpu.memory_space<vmem>>, vector<8x128xf32>,
      %cst_26 = arith.constant 0.000000e+00 : f32
      %41 = vector.broadcast %cst_26 : f32 to vector<8x128xf32>
      %c0_27 = arith.constant 0 : index
      %c0_28 = arith.constant 0 : index
      %42 = vector.load %arg9[%c0_27, %c0_28] : memref<8x128xf32, #tpu.memory_space<vmem>>, vector<8x128xf32>
      tpu.vector_store %arg9[%c0_27, %c0_28], %41 {strides = array<i32>} : memref<8x128xf32, #tpu.memory_space<vmem>>, vector<8x128xf32>,
    } else {
    }
    %c0 = arith.constant 0 : index
    %c0_1 = arith.constant 0 : index
    %c0_2 = arith.constant 0 : index
    %3 = vector.load %arg3[%c0, %c0_1, %c0_2] : memref<1x8x64xf32, #tpu.memory_space<vmem>>, vector<1x8x64xf32>
    %4 = vector.shape_cast %3 : vector<1x8x64xf32> to vector<8x64xf32>
    %c0_3 = arith.constant 0 : index
    %c0_4 = arith.constant 0 : index
    %5 = vector.load %arg4[%c0_3, %c0_4] : memref<64x256xf32, #tpu.memory_space<vmem>>, vector<64x256xf32>
    %cst = arith.constant dense<0.000000e+00> : vector<8x256xf32>
    %6 = tpu.matmul %4, %5, %cst {dimension_numbers = #tpu.dot_dimension_numbers<[1], [0], [0], [1], [0, 0, 1, 1], [], []>} : vector<8x64xf32>, vector<64x256xf32>, vector<8x256xf32> -> vector<8x256xf32>
    %7 = vector.extract_strided_slice %6 {offsets = [0, 0], sizes = [8, 128], strides = [1, 1]} : vector<8x256xf32> to vector<8x128xf32>
    %8 = vector.extract_strided_slice %6 {offsets = [0, 128], sizes = [8, 128], strides = [1, 1]} : vector<8x256xf32> to vector<8x128xf32>
    %9 = arith.mulf %7, %7 : vector<8x128xf32>
    %10 = arith.mulf %8, %8 : vector<8x128xf32>
    %11 = arith.addf %9, %10 : vector<8x128xf32>
    %12 = math.log %11 : vector<8x128xf32>
    %cst_5 = arith.constant 5.000000e-01 : f32
    %13 = vector.broadcast %cst_5 : f32 to vector<8x128xf32>
    %14 = arith.mulf %13, %12 : vector<8x128xf32>
    %15 = math.absf %14 : vector<8x128xf32>
    %cst_6 = arith.constant 0x7F800000 : f32
    %16 = vector.broadcast %cst_6 : f32 to vector<8x128xf32>
    %17 = arith.cmpf oeq, %15, %16 : vector<8x128xf32>
    %cst_7 = arith.constant 0.000000e+00 : f32
    %18 = vector.broadcast %cst_7 : f32 to vector<8x128xf32>
    %19 = arith.select %17, %18, %14 : vector<8x128xi1>, vector<8x128xf32>
    %cst_8 = arith.constant 1.000000e+00 : f32
    %cst_9 = arith.constant 0.000000e+00 : f32
    %20 = vector.broadcast %cst_8 : f32 to vector<8x128xf32>
    %21 = vector.broadcast %cst_9 : f32 to vector<8x128xf32>
    %22 = arith.select %17, %20, %21 : vector<8x128xi1>, vector<8x128xf32>
    %23 = arith.index_cast %arg1 : i32 to index
    %c0_10 = arith.constant 0 : index
    %c0_11 = arith.constant 0 : index
    %24 = vector.load %arg5[%23, %c0_10, %c0_11] : memref<4x128x128xbf16, #tpu.memory_space<vmem>>, vector<1x128x128xbf16>
    %25 = vector.shape_cast %24 : vector<1x128x128xbf16> to vector<128x128xbf16>
    %c0_12 = arith.constant 0 : index
    %c0_13 = arith.constant 0 : index
    %26 = vector.load %arg8[%c0_12, %c0_13] : memref<8x128xf32, #tpu.memory_space<vmem>>, vector<8x128xf32>
    %27 = arith.truncf %19 : vector<8x128xf32> to vector<8x128xbf16>
    %cst_14 = arith.constant dense<0.000000e+00> : vector<8x128xf32>
    %28 = tpu.matmul %27, %25, %cst_14 {dimension_numbers = #tpu.dot_dimension_numbers<[1], [0], [0], [1], [0, 0, 1, 1], [], []>} : vector<8x128xbf16>, vector<128x128xbf16>, vector<8x128xf32> -> vector<8x128xf32>
    %29 = arith.addf %26, %28 : vector<8x128xf32>
    %c0_15 = arith.constant 0 : index
    %c0_16 = arith.constant 0 : index
    %30 = vector.load %arg8[%c0_15, %c0_16] : memref<8x128xf32, #tpu.memory_space<vmem>>, vector<8x128xf32>
    tpu.vector_store %arg8[%c0_15, %c0_16], %29 {strides = array<i32>} : memref<8x128xf32, #tpu.memory_space<vmem>>, vector<8x128xf32>,
    %c0_17 = arith.constant 0 : index
    %c0_18 = arith.constant 0 : index
    %31 = vector.load %arg9[%c0_17, %c0_18] : memref<8x128xf32, #tpu.memory_space<vmem>>, vector<8x128xf32>
    %32 = arith.truncf %22 : vector<8x128xf32> to vector<8x128xbf16>
    %cst_19 = arith.constant dense<0.000000e+00> : vector<8x128xf32>
    %33 = tpu.matmul %32, %25, %cst_19 {dimension_numbers = #tpu.dot_dimension_numbers<[1], [0], [0], [1], [0, 0, 1, 1], [], []>} : vector<8x128xbf16>, vector<128x128xbf16>, vector<8x128xf32> -> vector<8x128xf32>
    %34 = arith.addf %31, %33 : vector<8x128xf32>
    %c0_20 = arith.constant 0 : index
    %c0_21 = arith.constant 0 : index
    %35 = vector.load %arg9[%c0_20, %c0_21] : memref<8x128xf32, #tpu.memory_space<vmem>>, vector<8x128xf32>
    tpu.vector_store %arg9[%c0_20, %c0_21], %34 {strides = array<i32>} : memref<8x128xf32, #tpu.memory_space<vmem>>, vector<8x128xf32>,
    %c3_i32 = arith.constant 3 : i32
    %36 = arith.cmpi eq, %arg1, %c3_i32 : i32
    %37 = arith.extui %36 : i1 to i32
    %c0_i32_22 = arith.constant 0 : i32
    %38 = arith.cmpi ne, %37, %c0_i32_22 : i32
    scf.if %38 {
      %c0_23 = arith.constant 0 : index
      %c0_24 = arith.constant 0 : index
      %39 = memref.load %arg2[%c0_23, %c0_24] : memref<1x1xf32, #tpu.memory_space<smem>>
      %c0_25 = arith.constant 0 : index
      %c0_26 = arith.constant 0 : index
      %40 = vector.load %arg8[%c0_25, %c0_26] : memref<8x128xf32, #tpu.memory_space<vmem>>, vector<8x128xf32>
      %c0_27 = arith.constant 0 : index
      %c0_28 = arith.constant 0 : index
      %41 = vector.load %arg9[%c0_27, %c0_28] : memref<8x128xf32, #tpu.memory_space<vmem>>, vector<8x128xf32>
      %42 = vector.broadcast %39 : f32 to vector<8x128xf32>
      %43 = arith.mulf %42, %41 : vector<8x128xf32>
      %44 = arith.addf %40, %43 : vector<8x128xf32>
      %c0_29 = arith.constant 0 : index
      %c0_30 = arith.constant 0 : index
      %45 = vector.load %arg6[%c0_29, %c0_30] : memref<1x128xf32, #tpu.memory_space<vmem>>, vector<1x128xf32>
      %46 = vector.broadcast %45 : vector<1x128xf32> to vector<8x128xf32>
      %47 = arith.addf %44, %46 : vector<8x128xf32>
      %48 = math.absf %47 : vector<8x128xf32>
      %c0_31 = arith.constant 0 : index
      %c0_32 = arith.constant 0 : index
      %49 = vector.load %arg7[%c0_31, %c0_32] : memref<8x128xf32, #tpu.memory_space<vmem>>, vector<8x128xf32>
      tpu.vector_store %arg7[%c0_31, %c0_32], %48 {strides = array<i32>} : memref<8x128xf32, #tpu.memory_space<vmem>>, vector<8x128xf32>,
    } else {
    }
    return
  }
  func.func @transform_0(%arg0: i32, %arg1: i32) -> (i32, i32) {
    %c0_i32 = arith.constant 0 : i32
    %c0_i32_0 = arith.constant 0 : i32
    %c0_i32_1 = arith.constant 0 : i32
    return %c0_i32, %c0_i32_0 : i32, i32
  }
  func.func @transform_1(%arg0: i32, %arg1: i32) -> (i32, i32, i32) {
    %c0_i32 = arith.constant 0 : i32
    %c0_i32_0 = arith.constant 0 : i32
    return %arg1, %arg0, %c0_i32 : i32, i32, i32
  }
  func.func @transform_2(%arg0: i32, %arg1: i32) -> (i32, i32) {
    %c0_i32 = arith.constant 0 : i32
    %c0_i32_0 = arith.constant 0 : i32
    %c0_i32_1 = arith.constant 0 : i32
    return %c0_i32, %c0_i32_0 : i32, i32
  }
  func.func @transform_3(%arg0: i32, %arg1: i32) -> (i32, i32, i32) {
    %c0_i32 = arith.constant 0 : i32
    %c0_i32_0 = arith.constant 0 : i32
    %c0_i32_1 = arith.constant 0 : i32
    %c0_i32_2 = arith.constant 0 : i32
    return %c0_i32, %c0_i32_0, %c0_i32_1 : i32, i32, i32
  }
  func.func @transform_4(%arg0: i32, %arg1: i32) -> (i32, i32) {
    %c0_i32 = arith.constant 0 : i32
    %c0_i32_0 = arith.constant 0 : i32
    %c0_i32_1 = arith.constant 0 : i32
    return %c0_i32, %c0_i32_0 : i32, i32
  }
  func.func @transform_5(%arg0: i32, %arg1: i32) -> (i32, i32) {
    %c0_i32 = arith.constant 0 : i32
    %c0_i32_0 = arith.constant 0 : i32
    return %arg0, %c0_i32 : i32, i32
  }
}

</mosaic_0001>

<llo_original>
// kernel: branch_1_fun.1
$region0: #{branch_1_fun.1}
  #allocation0 [shape = 'u32[]', space=smem, size = 0x4, offset = 0x4, fixed_abs, tag = 'smem constant byte address 0x4 - core index']
  #allocation1 [shape = 'u32[144,128]{1,0:T(1,128)}', space=vmem, size = 0x12000, scoped, tag = 'internal scratch']
  #allocation2 [shape = 'f32[8,128]{1,0:T(8,128)}', space=vmem, size = 0x1000, scoped, tag = 'scratch operand']
  #allocation3 [shape = 'f32[8,128]{1,0:T(8,128)}', space=vmem, size = 0x1000, scoped, tag = 'scratch operand']
  #allocation4 [shape = 'f32[1,1]{1,0:T(1,128)S(6)}', space=smem, size = 0x200, scoped, tag = 'scoped memory for branch_1_fun.1']
  %s0 = inlined_call_operand.<no memory space> [shape: f32[1,1], index: 0, kind: input, shape index: {}]
  %s1 = inlined_call_operand.vmem [shape: f32[4,8,64], index: 1, kind: input, shape index: {}]
  %s2 = inlined_call_operand.hbm [shape: f32[64,256], index: 2, kind: input, shape index: {}]
  %s3 = inlined_call_operand.vmem [shape: bf16[4,128,128], index: 3, kind: input, shape index: {}]
  %s4 = inlined_call_operand.vmem [shape: f32[1,128], index: 4, kind: input, shape index: {}]
  %s5 = inlined_call_operand.hbm [shape: f32[8,128], index: 5, kind: output, shape index: {}]
  %s6 = sld [smem:[#allocation0]]
  $region65: #{branch_1_fun.1} parent=0
    _
  %s8 = ssub.s32 1, %s6
  %s9 = scalar_select 0, %s8, %s6
  %10 = sst [smem:[#allocation4]] %s0
  $region1: #{branch_1_fun.1} parent=0
    #allocation5 [shape = 'u8[65536]{0}', space=vmem, size = 0x10000, scoped, tag = 'input window, operand 2, single buffered']
    #allocation6 [shape = 's32[2]{0}', space=sflag, size = 0x8, scoped, tag = 'scoped memory for branch_1_fun.1']
    #allocation7 [shape = 's32[2]{0}', space=sflag, size = 0x8, scoped, tag = 'scoped memory for branch_1_fun.1']
    #allocation8 [shape = 'u8[4096]{0}', space=vmem, size = 0x1000, scoped, tag = 'output window, operand 0, single buffered']
    %11 = vsyncpa [#allocation6], 0
    %12 = vsyncpa [#allocation7], 0
    loop: start=0, step=1, limit=6
    $region2: #{branch_1_fun.1} parent=1 // loop_pre_header
      _
    $region3: #{branch_1_fun.1} parent=1 // loop_header
      %s14 = sphi 0, %s18
      %p15 = scmp.ge.s32.totalorder %s14, 6
      %s21 = sphi 0, %s33
      %s22 = sphi 0, %s29
      %s23 = sphi 0, %s21
      %s24 = sphi 0, %s22
      %s25 = sphi 0, %s23
      %s26 = sphi 0, %s24
      %s34 = sphi 0, %s34
      %s36 = sphi 0, %s34
      %s37 = sphi 0, %s36
      %s51 = sphi 0, %s37
      %s59 = sphi 0, %s61
      %s62 = sphi 0, %s59
      %s63 = sphi 0, %s62
      %s79 = sphi 0, %s63
      %s83 = sphi 0, %s83
      %s85 = sphi 0, %s83
      %s86 = sphi 0, %s85
      %s100 = sphi 0, %s86
      %s104 = sphi 0, %s104
      %s106 = sphi 0, %s104
      %s107 = sphi 0, %s106
      %s121 = sphi 0, %s107
      %s125 = sphi 0, %s125
      %s127 = sphi 0, %s125
      %s128 = sphi 0, %s127
      %s142 = sphi 0, %s128
      %s148 = sphi 0, %s150
      %s151 = sphi 0, %s148
      %s152 = sphi 0, %s151
      %s168 = sphi 0, %s152
    $region4: #{branch_1_fun.1} parent=1 // loop_header_branch
      %17 = sbr.rel (%p15) target = $region8
    $region5: #{branch_1_fun.1} parent=1 // loop_body
      %s19 = ssub.s32 %s14, 1
      %s20 = ssub.s32 %s14, 2
      %s27 = sadd.s32 1, %s22
      %p28 = scmp.ge.s32.totalorder %s27, 4
      %s29 = scalar_select %p28, 0, %s27
      %s30 = sadd.s32 1, %s21
      %s31 = scalar_select %p28, %s30, %s21
      %p32 = scmp.ge.s32.totalorder %s31, 1
      %s33 = scalar_select %p32, 0, %s31
      %s35 = sadd.s32 %s34, 1
      %p38 = scmp.eq.s32.totalorder %s14, 3
      %p39 = scmp.ne.s32.totalorder %s34, %s36
      %p40 = scmp.eq.s32.totalorder %s14, 0
      %p41 = por %p39, %p40
      %p42 = scmp.ne.s32.totalorder %s34, %s36
      %p43 = scmp.eq.s32.totalorder %s19, 3
      %p44 = por %p42, %p43
      %p45 = scmp.ne.s32.totalorder %s36, %s37
      %p46 = scmp.eq.s32.totalorder %s19, 0
      %p47 = por %p45, %p46
      %p48 = scmp.ne.s32.totalorder %s36, %s37
      %p49 = scmp.eq.s32.totalorder %s20, 3
      %p50 = por %p48, %p49
      %p52 = scmp.ne.s32.totalorder %s37, %s51
      %p53 = scmp.eq.s32.totalorder %s20, 0
      %p54 = por %p52, %p53
      %s55 = ssub.s32 %s22, %s29
      %s56 = ssub.s32 %s21, %s33
      %s57 = sor.u32 %s55, %s56
      %p58 = scmp.eq.s32.totalorder %s57, 0
      %s60 = sadd.s32 %s59, 1
      %s61 = scalar_select %p58, %s59, %s60
      %p64 = pneg %p58
      %p65 = scmp.eq.s32.totalorder %s14, 3
      %p66 = por %p64, %p65
      %p67 = scmp.ne.s32.totalorder %s59, %s62
      %p68 = scmp.eq.s32.totalorder %s14, 0
      %p69 = por %p67, %p68
      %p70 = scmp.ne.s32.totalorder %s59, %s62
      %p71 = scmp.eq.s32.totalorder %s19, 3
      %p72 = por %p70, %p71
      %p73 = scmp.ne.s32.totalorder %s62, %s63
      %p74 = scmp.eq.s32.totalorder %s19, 0
      %p75 = por %p73, %p74
      %p76 = scmp.ne.s32.totalorder %s62, %s63
      %p77 = scmp.eq.s32.totalorder %s20, 3
      %p78 = por %p76, %p77
      %p80 = scmp.ne.s32.totalorder %s63, %s79
      %p81 = scmp.eq.s32.totalorder %s20, 0
      %p82 = por %p80, %p81
      %s84 = sadd.s32 %s83, 1
      %p87 = scmp.eq.s32.totalorder %s14, 3
      %p88 = scmp.ne.s32.totalorder %s83, %s85
      %p89 = scmp.eq.s32.totalorder %s14, 0
      %p90 = por %p88, %p89
      %p91 = scmp.ne.s32.totalorder %s83, %s85
      %p92 = scmp.eq.s32.totalorder %s19, 3
      %p93 = por %p91, %p92
      %p94 = scmp.ne.s32.totalorder %s85, %s86
      %p95 = scmp.eq.s32.totalorder %s19, 0
      %p96 = por %p94, %p95
      %p97 = scmp.ne.s32.totalorder %s85, %s86
      %p98 = scmp.eq.s32.totalorder %s20, 3
      %p99 = por %p97, %p98
      %p101 = scmp.ne.s32.totalorder %s86, %s100
      %p102 = scmp.eq.s32.totalorder %s20, 0
      %p103 = por %p101, %p102
      %s105 = sadd.s32 %s104, 1
      %p108 = scmp.eq.s32.totalorder %s14, 3
      %p109 = scmp.ne.s32.totalorder %s104, %s106
      %p110 = scmp.eq.s32.totalorder %s14, 0
      %p111 = por %p109, %p110
      %p112 = scmp.ne.s32.totalorder %s104, %s106
      %p113 = scmp.eq.s32.totalorder %s19, 3
      %p114 = por %p112, %p113
      %p115 = scmp.ne.s32.totalorder %s106, %s107
      %p116 = scmp.eq.s32.totalorder %s19, 0
      %p117 = por %p115, %p116
      %p118 = scmp.ne.s32.totalorder %s106, %s107
      %p119 = scmp.eq.s32.totalorder %s20, 3
      %p120 = por %p118, %p119
      %p122 = scmp.ne.s32.totalorder %s107, %s121
      %p123 = scmp.eq.s32.totalorder %s20, 0
      %p124 = por %p122, %p123
      %s126 = sadd.s32 %s125, 1
      %p129 = scmp.eq.s32.totalorder %s14, 3
      %p130 = scmp.ne.s32.totalorder %s125, %s127
      %p131 = scmp.eq.s32.totalorder %s14, 0
      %p132 = por %p130, %p131
      %p133 = scmp.ne.s32.totalorder %s125, %s127
      %p134 = scmp.eq.s32.totalorder %s19, 3
      %p135 = por %p133, %p134
      %p136 = scmp.ne.s32.totalorder %s127, %s128
      %p137 = scmp.eq.s32.totalorder %s19, 0
      %p138 = por %p136, %p137
      %p139 = scmp.ne.s32.totalorder %s127, %s128
      %p140 = scmp.eq.s32.totalorder %s20, 3
      %p141 = por %p139, %p140
      %p143 = scmp.ne.s32.totalorder %s128, %s142
      %p144 = scmp.eq.s32.totalorder %s20, 0
      %p145 = por %p143, %p144
      %s146 = ssub.s32 %s21, %s33
      %p147 = scmp.eq.s32.totalorder %s146, 0
      %s149 = sadd.s32 %s148, 1
      %s150 = scalar_select %p147, %s148, %s149
      %p153 = pneg %p147
      %p154 = scmp.eq.s32.totalorder %s14, 3
      %p155 = por %p153, %p154
      %p156 = scmp.ne.s32.totalorder %s148, %s151
      %p157 = scmp.eq.s32.totalorder %s14, 0
      %p158 = por %p156, %p157
      %p159 = scmp.ne.s32.totalorder %s148, %s151
      %p160 = scmp.eq.s32.totalorder %s19, 3
      %p161 = por %p159, %p160
      %p162 = scmp.ne.s32.totalorder %s151, %s152
      %p163 = scmp.eq.s32.totalorder %s19, 0
      %p164 = por %p162, %p163
      %p165 = scmp.ne.s32.totalorder %s151, %s152
      %p166 = scmp.eq.s32.totalorder %s20, 3
      %p167 = por %p165, %p166
      %p169 = scmp.ne.s32.totalorder %s152, %s168
      %p170 = scmp.eq.s32.totalorder %s20, 0
      %p171 = por %p169, %p170
      %p172 = scmp.le.s32.totalorder 1, %s14
      %p173 = scmp.lt.s32.totalorder %s14, 5
      %p174 = pnand %p172, %p173
      %p175 = pneg %p174
      // Predicated region
      $region9: #{branch_1_fun.1} parent=5 // pred_check
        _
      $region10: #{branch_1_fun.1} parent=5 // pred_check_branch
        %177 = sbr.rel (%p174) target = $region12
      $region11: #{branch_1_fun.1} parent=5 // pred_region
        %s178 = ssub.s32 %s14, 1
        // Predicated region
        $region13: #{branch_1_fun.1} parent=11 // pred_check
          %p179 = pneg %p47
        $region14: #{branch_1_fun.1} parent=11 // pred_check_branch
          %181 = sbr.rel (%p179) target = $region16
        $region15: #{branch_1_fun.1} parent=11 // pred_region
          _
        $region16: #{branch_1_fun.1} parent=11 // pred_fallthru
          _
        // Predicated region
        $region17: #{branch_1_fun.1} parent=11 // pred_check
          %p182 = pneg %p96
        $region18: #{branch_1_fun.1} parent=11 // pred_check_branch
          %184 = sbr.rel (%p182) target = $region20
        $region19: #{branch_1_fun.1} parent=11 // pred_region
          %s186 = ssub.s32 2048, 2048
          %187 = vsyncadd [#allocation6], %s186
          %s188 = sshll.u32 [#allocation5], 4
          %s189 = int_to_ptr.vmem [resolvable:$true] %s188
          %194 = dma.hbm_to_vmem [thread:$0]  %s2, 2048, %s189, [#allocation6], 256, 256, 16
        $region20: #{branch_1_fun.1} parent=11 // pred_fallthru
          _
        // Predicated region
        $region21: #{branch_1_fun.1} parent=11 // pred_check
          %p195 = pneg %p117
        $region22: #{branch_1_fun.1} parent=11 // pred_check_branch
          %197 = sbr.rel (%p195) target = $region24
        $region23: #{branch_1_fun.1} parent=11 // pred_region
          _
        $region24: #{branch_1_fun.1} parent=11 // pred_fallthru
          _
        // Predicated region
        $region25: #{branch_1_fun.1} parent=11 // pred_check
          %p198 = pneg %p138
        $region26: #{branch_1_fun.1} parent=11 // pred_check_branch
          %200 = sbr.rel (%p198) target = $region28
        $region27: #{branch_1_fun.1} parent=11 // pred_region
          _
        $region28: #{branch_1_fun.1} parent=11 // pred_fallthru
          _
      $region12: #{branch_1_fun.1} parent=5 // pred_fallthru
        _
      %p201 = scmp.lt.s32.totalorder %s14, 4
      // Predicated region
      $region29: #{branch_1_fun.1} parent=5 // pred_check
        %p202 = pneg %p201
      $region30: #{branch_1_fun.1} parent=5 // pred_check_branch
        %204 = sbr.rel (%p202) target = $region32
      $region31: #{branch_1_fun.1} parent=5 // pred_region
        // Predicated region
        $region33: #{branch_1_fun.1} parent=31 // pred_check
          %p205 = pneg %p69
        $region34: #{branch_1_fun.1} parent=31 // pred_check_branch
          %207 = sbr.rel (%p205) target = $region36
        $region35: #{branch_1_fun.1} parent=31 // pred_region
          %p208 = scmp.lt.s32.totalorder %s22, 3
          %s209 = scalar_select %p208, %s22, 3
          %p210 = scmp.lt.s32.totalorder %s21, 0
          %s211 = scalar_select %p210, %s21, 0
          %s212 = sadd.s32 %s211, %s209
          %s213 = smul.addr %s212, 8
          %s214 = scalar_lea.vmem %s1, %s213
        $region36: #{branch_1_fun.1} parent=31 // pred_fallthru
          _
      $region32: #{branch_1_fun.1} parent=5 // pred_fallthru
        _
      %p215 = scmp.le.s32.totalorder 1, %s14
      %p216 = scmp.lt.s32.totalorder %s14, 5
      %p217 = pnand %p215, %p216
      %p218 = pneg %p217
      // Predicated region
      $region37: #{branch_1_fun.1} parent=5 // pred_check
        _
      $region38: #{branch_1_fun.1} parent=5 // pred_check_branch
        %220 = sbr.rel (%p217) target = $region40
      $region39: #{branch_1_fun.1} parent=5 // pred_region
        %s221 = ssub.s32 %s14, 1
        // Predicated region
        $region41: #{branch_1_fun.1} parent=39 // pred_check
          %p222 = pneg %p96
        $region42: #{branch_1_fun.1} parent=39 // pred_check_branch
          %224 = sbr.rel (%p222) target = $region44
        $region43: #{branch_1_fun.1} parent=39 // pred_region
          %225 = dma.done [#allocation6], 2048
        $region44: #{branch_1_fun.1} parent=39 // pred_fallthru
          _
        %p226 = pneg %p47
        %p227 = pneg %p44
        %p228 = scmp.lt.s32.totalorder %s24, 3
        %s229 = scalar_select %p228, %s24, 3
        %p230 = scmp.lt.s32.totalorder %s23, 0
        %s231 = scalar_select %p230, %s23, 0
        %s232 = sadd.s32 %s231, %s229
        %s233 = smul.addr %s232, 8
        %s234 = scalar_lea.vmem %s1, %s233
        %p235 = pneg %p75
        %p236 = pneg %p72
        %p237 = pneg %p96
        %p238 = pneg %p93
        %p239 = pneg %p117
        %p240 = pneg %p114
        %p241 = pneg %p138
        %p242 = pneg %p135
        %p243 = pneg %p164
        %p244 = pneg %p161
        %p245 = scmp.lt.s32.totalorder %s24, 3
        %s246 = scalar_select %p245, %s24, 3
        %p247 = scmp.lt.s32.totalorder %s23, 0
        %s248 = scalar_select %p247, %s23, 0
        %s249 = sadd.s32 %s248, %s246
        %s250 = smul.addr %s249, 8
        %s251 = scalar_lea.vmem %s1, %s250
        %p253 = scmp.eq.s32.totalorder %s24, 0
        // Predicated region
        $region45: #{branch_1_fun.1} parent=39 // pred_check
          %p254 = pneg %p253
        $region46: #{branch_1_fun.1} parent=39 // pred_check_branch
          %256 = sbr.rel (%p254) target = $region48
        $region47: #{branch_1_fun.1} parent=39 // pred_region
          %257 = vst [vmem:[#allocation2] sm:$0xff] 0.0
          %258 = vst [vmem:[#allocation3] sm:$0xff] 0.0
        $region48: #{branch_1_fun.1} parent=39 // pred_fallthru
          _
        %v259 = vld [vmem:[%s251] sm:$0xff]
        %v260 = vld [vmem:[#allocation5] sm:$0xff]
        %v261 = vld [vmem:[#allocation5 + $0x8] sm:$0xff]
        %v262 = vld [vmem:[#allocation5 + $0x10] sm:$0xff]
        %v263 = vld [vmem:[#allocation5 + $0x18] sm:$0xff]
        %v264 = vld [vmem:[#allocation5 + $0x20] sm:$0xff]
        %v265 = vld [vmem:[#allocation5 + $0x28] sm:$0xff]
        %v266 = vld [vmem:[#allocation5 + $0x30] sm:$0xff]
        %v267 = vld [vmem:[#allocation5 + $0x38] sm:$0xff]
        %v268 = vld [vmem:[#allocation5 + $0x40] sm:$0xff]
        %v269 = vld [vmem:[#allocation5 + $0x48] sm:$0xff]
        %v270 = vld [vmem:[#allocation5 + $0x50] sm:$0xff]
        %v271 = vld [vmem:[#allocation5 + $0x58] sm:$0xff]
        %v272 = vld [vmem:[#allocation5 + $0x60] sm:$0xff]
        %v273 = vld [vmem:[#allocation5 + $0x68] sm:$0xff]
        %v274 = vld [vmem:[#allocation5 + $0x70] sm:$0xff]
        %v275 = vld [vmem:[#allocation5 + $0x78] sm:$0xff]
        %vm276 = vcmask 523264
        %v278 = vsel %vm276, %v259, 0
        %280 = vmatprep.subr.mxu0 0.0
        %281 = vmatpush1.msra.mxu0 0.0
        %282 = vmatprep.subr.mxu0 0.0
        %283 = vmatpush1.msra.mxu0 0.0
        %284 = vmatprep.subr.mxu0 0.0
        %285 = vmatpush1.msra.mxu0 0.0
        %286 = vmatprep.subr.mxu0 0.0
        %287 = vmatpush1.msra.mxu0 0.0
        %288 = vmatprep.subr.mxu0 0.0
        %289 = vmatpush1.msra.mxu0 0.0
        %290 = vmatprep.subr.mxu0 0.0
        %291 = vmatpush1.msra.mxu0 0.0
        %292 = vmatprep.subr.mxu0 0.0
        %293 = vmatpush1.msra.mxu0 0.0
        %294 = vmatprep.subr.mxu0 0.0
        %295 = vmatpush1.msra.mxu0 0.0
        %296 = vmatprep.subr.mxu0 %v275
        %297 = vmatpush1.msra.mxu0 %v274
        %298 = vmatprep.subr.mxu0 %v273
        %299 = vmatpush1.msra.mxu0 %v272
        %300 = vmatprep.subr.mxu0 %v271
        %301 = vmatpush1.msra.mxu0 %v270
        %302 = vmatprep.subr.mxu0 %v269
        %303 = vmatpush1.msra.mxu0 %v268
        %304 = vmatprep.subr.mxu0 %v267
        %305 = vmatpush1.msra.mxu0 %v266
        %306 = vmatprep.subr.mxu0 %v265
        %307 = vmatpush1.msra.mxu0 %v264
        %308 = vmatprep.subr.mxu0 %v263
        %309 = vmatpush1.msra.mxu0 %v262
        %310 = vmatprep.subr.mxu0 %v261
        %311 = vmatpush1.msra.mxu0 %v260
        %312 = vmatprep.subr.mxu0 0.0
        %313 = vmatpush2.msra.mxu0 0.0
        %314 = vmatprep.subr.mxu0 0.0
        %315 = vmatpush2.msra.mxu0 0.0
        %316 = vmatprep.subr.mxu0 0.0
        %317 = vmatpush2.msra.mxu0 0.0
        %318 = vmatprep.subr.mxu0 0.0
        %319 = vmatpush2.msra.mxu0 0.0
        %320 = vmatprep.subr.mxu0 0.0
        %321 = vmatpush2.msra.mxu0 0.0
        %322 = vmatprep.subr.mxu0 0.0
        %323 = vmatpush2.msra.mxu0 0.0
        %324 = vmatprep.subr.mxu0 0.0
        %325 = vmatpush2.msra.mxu0 0.0
        %326 = vmatprep.subr.mxu0 0.0
        %327 = vmatpush2.msra.mxu0 0.0
        %328 = vmatprep.subr.mxu0 0.0
        %329 = vmatpush2.msra.mxu0 0.0
        %330 = vmatprep.subr.mxu0 0.0
        %331 = vmatpush2.msra.mxu0 0.0
        %332 = vmatprep.subr.mxu0 0.0
        %333 = vmatpush2.msra.mxu0 0.0
        %334 = vmatprep.subr.mxu0 0.0
        %335 = vmatpush2.msra.mxu0 0.0
        %336 = vmatprep.subr.mxu0 0.0
        %337 = vmatpush2.msra.mxu0 0.0
        %338 = vmatprep.subr.mxu0 0.0
        %339 = vmatpush2.msra.mxu0 0.0
        %340 = vmatprep.subr.mxu0 0.0
        %341 = vmatpush2.msra.mxu0 0.0
        %342 = vmatprep.subr.mxu0 0.0
        %343 = vmatpush2.msra.mxu0 0.0
        %344 = vmatprep.mubr.f32.mxu0 0.0
        %345 = vmatmul.mubr.f32.gmra.mxu0 %v278
        %v346 = vpop.f32.mrf.mxu0
        %v347 = vadd.f32 0.0, %v346
        %v348 = vpop.f32.mrf.mxu0
        %v349 = vadd.f32 0.0, %v348
        %350 = vdwg.mxu0
        %v351 = vmul.f32 %v347, %v347
        %v352 = vmul.f32 %v349, %v349
        %v353 = vadd.f32 %v351, %v352
        %v354 = vlog2.pop %v353
        %v355 = vmul.f32 %v354, 0.6931472
        %v356 = vmul.f32 %v355, 0.5
        %v357 = vand.u32 2147483647, %v356
        %vm358 = vcmp.eq.f32.partialorder %v357, inf
        %v359 = vsel %vm358, 0.0, %v356
        %v360 = vsel %vm358, 1.0, 0.0
        %s361 = smul.u32 %s24, 16
        %s362 = smul.addr %s361, 4
        %s363 = scalar_lea.vmem %s3, %s362
        %v364 = vld [vmem:[%s363] sm:$0xf]
        %v365 = vld [vmem:[%s363 + $0x4] sm:$0xf]
        %v366 = vld [vmem:[%s363 + $0x8] sm:$0xf]
        %v367 = vld [vmem:[%s363 + $0xc] sm:$0xf]
        %v368 = vld [vmem:[%s363 + $0x10] sm:$0xf]
        %v369 = vld [vmem:[%s363 + $0x14] sm:$0xf]
        %v370 = vld [vmem:[%s363 + $0x18] sm:$0xf]
        %v371 = vld [vmem:[%s363 + $0x1c] sm:$0xf]
        %v372 = vld [vmem:[%s363 + $0x20] sm:$0xf]
        %v373 = vld [vmem:[%s363 + $0x24] sm:$0xf]
        %v374 = vld [vmem:[%s363 + $0x28] sm:$0xf]
        %v375 = vld [vmem:[%s363 + $0x2c] sm:$0xf]
        %v376 = vld [vmem:[%s363 + $0x30] sm:$0xf]
        %v377 = vld [vmem:[%s363 + $0x34] sm:$0xf]
        %v378 = vld [vmem:[%s363 + $0x38] sm:$0xf]
        %v379 = vld [vmem:[%s363 + $0x3c] sm:$0xf]
        %v380 = vld [vmem:[#allocation2] sm:$0xff]
        %v381 = vpack.c.bf16 %v359, %v359
        %v398 = vunpack.c.l.b16 %v364
        %v399 = vunpack.c.l.b16 %v365
        %v400 = vunpack.c.l.b16 %v366
        %v401 = vunpack.c.l.b16 %v367
        %v402 = vunpack.c.l.b16 %v368
        %v403 = vunpack.c.l.b16 %v369
        %v404 = vunpack.c.l.b16 %v370
        %v405 = vunpack.c.l.b16 %v371
        %v406 = vunpack.c.l.b16 %v372
        %v407 = vunpack.c.l.b16 %v373
        %v408 = vunpack.c.l.b16 %v374
        %v409 = vunpack.c.l.b16 %v375
        %v410 = vunpack.c.l.b16 %v376
        %v411 = vunpack.c.l.b16 %v377
        %v412 = vunpack.c.l.b16 %v378
        %v413 = vunpack.c.l.b16 %v379
        %v414 = vpack.c.b16 %v399, %v398
        %v415 = vpack.c.b16 %v401, %v400
        %v416 = vpack.c.b16 %v403, %v402
        %v417 = vpack.c.b16 %v405, %v404
        %v418 = vpack.c.b16 %v407, %v406
        %v419 = vpack.c.b16 %v409, %v408
        %v420 = vpack.c.b16 %v411, %v410
        %v421 = vpack.c.b16 %v413, %v412
        %430 = vmatprep.subr.bf16.mxu0 0
        %431 = vmatpush1.bf16.msra.mxu0 %v421
        %432 = vmatprep.subr.bf16.mxu0 0
        %433 = vmatpush1.bf16.msra.mxu0 %v420
        %434 = vmatprep.subr.bf16.mxu0 0
        %435 = vmatpush1.bf16.msra.mxu0 %v419
        %436 = vmatprep.subr.bf16.mxu0 0
        %437 = vmatpush1.bf16.msra.mxu0 %v418
        %438 = vmatprep.subr.bf16.mxu0 0
        %439 = vmatpush1.bf16.msra.mxu0 %v417
        %440 = vmatprep.subr.bf16.mxu0 0
        %441 = vmatpush1.bf16.msra.mxu0 %v416
        %442 = vmatprep.subr.bf16.mxu0 0
        %443 = vmatpush1.bf16.msra.mxu0 %v415
        %444 = vmatprep.subr.bf16.mxu0 0
        %445 = vmatpush1.bf16.msra.mxu0 %v414
        %446 = vmatprep.subr.bf16.mxu0 0
        %447 = vmatpush2.bf16.msra.mxu0 0
        %448 = vmatprep.subr.bf16.mxu0 0
        %449 = vmatpush2.bf16.msra.mxu0 0
        %450 = vmatprep.subr.bf16.mxu0 0
        %451 = vmatpush2.bf16.msra.mxu0 0
        %452 = vmatprep.subr.bf16.mxu0 0
        %453 = vmatpush2.bf16.msra.mxu0 0
        %454 = vmatprep.subr.bf16.mxu0 0
        %455 = vmatpush2.bf16.msra.mxu0 0
        %456 = vmatprep.subr.bf16.mxu0 0
        %457 = vmatpush2.bf16.msra.mxu0 0
        %458 = vmatprep.subr.bf16.mxu0 0
        %459 = vmatpush2.bf16.msra.mxu0 0
        %460 = vmatprep.subr.bf16.mxu0 0
        %461 = vmatpush2.bf16.msra.mxu0 0
        %462 = vmatprep.mubr.bf16.mxu0 0
        %463 = vmatmul.mubr.bf16.gmra.mxu0 %v381
        %v464 = vpop.f32.mrf.mxu0
        %v465 = vadd.f32 0.0, %v464
        %v466 = vpop.f32.mrf.mxu0
        %v467 = vpop.f32.mrf.mxu0
        %v468 = vpop.f32.mrf.mxu0
        %469 = vdwg.mxu0
        %v470 = vadd.f32 %v380, %v465
        %471 = vst [vmem:[#allocation2] sm:$0xff] %v470
        %v472 = vld [vmem:[#allocation3] sm:$0xff]
        %v473 = vpack.c.bf16 %v360, %v360
        %474 = vmatprep.subr.bf16.mxu0 0
        %475 = vmatpush1.bf16.msra.mxu0 %v421
        %476 = vmatprep.subr.bf16.mxu0 0
        %477 = vmatpush1.bf16.msra.mxu0 %v420
        %478 = vmatprep.subr.bf16.mxu0 0
        %479 = vmatpush1.bf16.msra.mxu0 %v419
        %480 = vmatprep.subr.bf16.mxu0 0
        %481 = vmatpush1.bf16.msra.mxu0 %v418
        %482 = vmatprep.subr.bf16.mxu0 0
        %483 = vmatpush1.bf16.msra.mxu0 %v417
        %484 = vmatprep.subr.bf16.mxu0 0
        %485 = vmatpush1.bf16.msra.mxu0 %v416
        %486 = vmatprep.subr.bf16.mxu0 0
        %487 = vmatpush1.bf16.msra.mxu0 %v415
        %488 = vmatprep.subr.bf16.mxu0 0
        %489 = vmatpush1.bf16.msra.mxu0 %v414
        %490 = vmatprep.subr.bf16.mxu0 0
        %491 = vmatpush2.bf16.msra.mxu0 0
        %492 = vmatprep.subr.bf16.mxu0 0
        %493 = vmatpush2.bf16.msra.mxu0 0
        %494 = vmatprep.subr.bf16.mxu0 0
        %495 = vmatpush2.bf16.msra.mxu0 0
        %496 = vmatprep.subr.bf16.mxu0 0
        %497 = vmatpush2.bf16.msra.mxu0 0
        %498 = vmatprep.subr.bf16.mxu0 0
        %499 = vmatpush2.bf16.msra.mxu0 0
        %500 = vmatprep.subr.bf16.mxu0 0
        %501 = vmatpush2.bf16.msra.mxu0 0
        %502 = vmatprep.subr.bf16.mxu0 0
        %503 = vmatpush2.bf16.msra.mxu0 0
        %504 = vmatprep.subr.bf16.mxu0 0
        %505 = vmatpush2.bf16.msra.mxu0 0
        %506 = vmatprep.mubr.bf16.mxu0 0
        %507 = vmatmul.mubr.bf16.gmra.mxu0 %v473
        %v508 = vpop.f32.mrf.mxu0
        %v509 = vadd.f32 0.0, %v508
        %v510 = vpop.f32.mrf.mxu0
        %v511 = vpop.f32.mrf.mxu0
        %v512 = vpop.f32.mrf.mxu0
        %513 = vdwg.mxu0
        %v514 = vadd.f32 %v472, %v509
        %515 = vst [vmem:[#allocation3] sm:$0xff] %v514
        %p516 = scmp.eq.s32.totalorder %s24, 3
        // Predicated region
        $region49: #{branch_1_fun.1} parent=39 // pred_check
          %p517 = pneg %p516
        $region50: #{branch_1_fun.1} parent=39 // pred_check_branch
          %519 = sbr.rel (%p517) target = $region52
        $region51: #{branch_1_fun.1} parent=39 // pred_region
          %s520 = sld [smem:[#allocation4]]
          %v521 = vld [vmem:[#allocation2] sm:$0xff]
          %v522 = vld [vmem:[#allocation3] sm:$0xff]
          %v523 = vstv %s520
          %v524 = vmul.f32 %v523, %v522
          %v525 = vadd.f32 %v521, %v524
          %v526 = vld [vmem:[%s4] sm:$0x1]
          %v528 = vlaneseq
          %v529 = vshrl.u32 %v528, 7
          %v530 = vsub.s32 0, %v529
          %v531 = vrot.slane %v526, %v530
          %v533 = vadd.f32 %v525, %v531
          %v534 = vand.u32 2147483647, %v533
          %535 = vst [vmem:[#allocation8] sm:$0xff] %v534
        $region52: #{branch_1_fun.1} parent=39 // pred_fallthru
          _
        // Predicated region
        $region53: #{branch_1_fun.1} parent=39 // pred_check
          %p536 = pneg %p161
        $region54: #{branch_1_fun.1} parent=39 // pred_check_branch
          %538 = sbr.rel (%p536) target = $region56
        $region55: #{branch_1_fun.1} parent=39 // pred_region
          %s540 = ssub.s32 128, 128
          %541 = vsyncadd [#allocation7], %s540
          %s542 = smul.addr %s23, 128
          %s543 = scalar_lea.hbm %s5, %s542
          %s545 = sshll.u32 [#allocation8], 4
          %s546 = int_to_ptr.vmem [resolvable:$true] %s545
          %548 = dma.vmem_to_hbm [thread:$0]  %s546, 128, %s543, [#allocation7]
        $region56: #{branch_1_fun.1} parent=39 // pred_fallthru
          _
        // Predicated region
        $region57: #{branch_1_fun.1} parent=39 // pred_check
          %p549 = pneg %p161
        $region58: #{branch_1_fun.1} parent=39 // pred_check_branch
          %551 = sbr.rel (%p549) target = $region60
        $region59: #{branch_1_fun.1} parent=39 // pred_region
          %552 = dma.done [#allocation7], 128
        $region60: #{branch_1_fun.1} parent=39 // pred_fallthru
          _
      $region40: #{branch_1_fun.1} parent=5 // pred_fallthru
        _
      %p553 = scmp.le.s32.totalorder 2, %s14
      // Predicated region
      $region61: #{branch_1_fun.1} parent=5 // pred_check
        %p554 = pneg %p553
      $region62: #{branch_1_fun.1} parent=5 // pred_check_branch
        %556 = sbr.rel (%p554) target = $region64
      $region63: #{branch_1_fun.1} parent=5 // pred_region
        %s557 = ssub.s32 %s14, 2
      $region64: #{branch_1_fun.1} parent=5 // pred_fallthru
        _
    $region6: #{branch_1_fun.1} parent=1 // loop_footer
      %s18 = sadd.s32 1, %s14
    $region7: #{branch_1_fun.1} parent=1 // loop_footer_branch
      %13 = sbr.rel target = $region3
    $region8: #{branch_1_fun.1} parent=1 // loop_exit
      _
    %558 = vsyncpa [#allocation6], 1
    %s559 = scalar_lea.sflag [#allocation6], 1
    %560 = vsyncpa %s559, 1
    %561 = vsyncpa [#allocation7], 1
    %s562 = scalar_lea.sflag [#allocation7], 1
    %563 = vsyncpa %s562, 1

// kernel: fft_patch_embed.1
$region0: #{fft_patch_embed.1}
  #allocation0 [shape = 'u32[]', space=smem, size = 0x4, offset = 0x4, fixed_abs, tag = 'smem constant byte address 0x4 - core index']
  #allocation1 [shape = 'u32[144,128]{1,0:T(1,128)}', space=vmem, size = 0x12000, scoped, tag = 'internal scratch']
  #allocation2 [shape = 'f32[8,128]{1,0:T(8,128)}', space=vmem, size = 0x1000, scoped, tag = 'scratch operand']
  %s0 = inlined_call_operand.vmem [shape: f32[4,8,64], index: 0, kind: input, shape index: {}]
  %s1 = inlined_call_operand.vmem [shape: f32[64,256], index: 1, kind: input, shape index: {}]
  %s2 = inlined_call_operand.vmem [shape: bf16[4,128,128], index: 2, kind: input, shape index: {}]
  %s3 = inlined_call_operand.vmem [shape: f32[1,128], index: 3, kind: input, shape index: {}]
  %s4 = inlined_call_operand.hbm [shape: f32[8,128], index: 4, kind: output, shape index: {0}]
  %s5 = inlined_call_operand.vmem [shape: f32[1,8,128], index: 5, kind: output, shape index: {1}]
  %s6 = inlined_call_operand.vmem [shape: f32[1,8,128], index: 6, kind: output, shape index: {2}]
  %7 = xla_tuple %s4, %s5, %s6
  %s8 = sld [smem:[#allocation0]]
  $region73: #{fft_patch_embed.1} parent=0
    _
  %s10 = ssub.s32 1, %s8
  %s11 = scalar_select 0, %s10, %s8
  $region1: #{fft_patch_embed.1} parent=0
    #allocation3 [shape = 'u8[4096]{0}', space=vmem, size = 0x1000, scoped, tag = 'output window, operand 0, single buffered']
    #allocation4 [shape = 's32[2]{0}', space=sflag, size = 0x8, scoped, tag = 'scoped memory for fft_patch_embed.1']
    %12 = vsyncpa [#allocation4], 0
    loop: start=0, step=1, limit=6
    $region2: #{fft_patch_embed.1} parent=1 // loop_pre_header
      _
    $region3: #{fft_patch_embed.1} parent=1 // loop_header
      %s14 = sphi 0, %s18
      %p15 = scmp.ge.s32.totalorder %s14, 6
      %s21 = sphi 0, %s33
      %s22 = sphi 0, %s29
      %s23 = sphi 0, %s21
      %s24 = sphi 0, %s22
      %s25 = sphi 0, %s23
      %s26 = sphi 0, %s24
      %s38 = sphi 0, %s40
      %s41 = sphi 0, %s38
      %s42 = sphi 0, %s41
      %s58 = sphi 0, %s42
      %s62 = sphi 0, %s62
      %s64 = sphi 0, %s62
      %s65 = sphi 0, %s64
      %s79 = sphi 0, %s65
      %s83 = sphi 0, %s83
      %s85 = sphi 0, %s83
      %s86 = sphi 0, %s85
      %s100 = sphi 0, %s86
      %s104 = sphi 0, %s104
      %s106 = sphi 0, %s104
      %s107 = sphi 0, %s106
      %s121 = sphi 0, %s107
      %s127 = sphi 0, %s129
      %s130 = sphi 0, %s127
      %s131 = sphi 0, %s130
      %s147 = sphi 0, %s131
      %s153 = sphi 0, %s155
      %s156 = sphi 0, %s153
      %s157 = sphi 0, %s156
      %s173 = sphi 0, %s157
      %s179 = sphi 0, %s181
      %s182 = sphi 0, %s179
      %s183 = sphi 0, %s182
      %s199 = sphi 0, %s183
    $region4: #{fft_patch_embed.1} parent=1 // loop_header_branch
      %17 = sbr.rel (%p15) target = $region8
    $region5: #{fft_patch_embed.1} parent=1 // loop_body
      %s19 = ssub.s32 %s14, 1
      %s20 = ssub.s32 %s14, 2
      %s27 = sadd.s32 1, %s22
      %p28 = scmp.ge.s32.totalorder %s27, 4
      %s29 = scalar_select %p28, 0, %s27
      %s30 = sadd.s32 1, %s21
      %s31 = scalar_select %p28, %s30, %s21
      %p32 = scmp.ge.s32.totalorder %s31, 1
      %s33 = scalar_select %p32, 0, %s31
      %s34 = ssub.s32 %s22, %s29
      %s35 = ssub.s32 %s21, %s33
      %s36 = sor.u32 %s34, %s35
      %p37 = scmp.eq.s32.totalorder %s36, 0
      %s39 = sadd.s32 %s38, 1
      %s40 = scalar_select %p37, %s38, %s39
      %p43 = pneg %p37
      %p44 = scmp.eq.s32.totalorder %s14, 3
      %p45 = por %p43, %p44
      %p46 = scmp.ne.s32.totalorder %s38, %s41
      %p47 = scmp.eq.s32.totalorder %s14, 0
      %p48 = por %p46, %p47
      %p49 = scmp.ne.s32.totalorder %s38, %s41
      %p50 = scmp.eq.s32.totalorder %s19, 3
      %p51 = por %p49, %p50
      %p52 = scmp.ne.s32.totalorder %s41, %s42
      %p53 = scmp.eq.s32.totalorder %s19, 0
      %p54 = por %p52, %p53
      %p55 = scmp.ne.s32.totalorder %s41, %s42
      %p56 = scmp.eq.s32.totalorder %s20, 3
      %p57 = por %p55, %p56
      %p59 = scmp.ne.s32.totalorder %s42, %s58
      %p60 = scmp.eq.s32.totalorder %s20, 0
      %p61 = por %p59, %p60
      %s63 = sadd.s32 %s62, 1
      %p66 = scmp.eq.s32.totalorder %s14, 3
      %p67 = scmp.ne.s32.totalorder %s62, %s64
      %p68 = scmp.eq.s32.totalorder %s14, 0
      %p69 = por %p67, %p68
      %p70 = scmp.ne.s32.totalorder %s62, %s64
      %p71 = scmp.eq.s32.totalorder %s19, 3
      %p72 = por %p70, %p71
      %p73 = scmp.ne.s32.totalorder %s64, %s65
      %p74 = scmp.eq.s32.totalorder %s19, 0
      %p75 = por %p73, %p74
      %p76 = scmp.ne.s32.totalorder %s64, %s65
      %p77 = scmp.eq.s32.totalorder %s20, 3
      %p78 = por %p76, %p77
      %p80 = scmp.ne.s32.totalorder %s65, %s79
      %p81 = scmp.eq.s32.totalorder %s20, 0
      %p82 = por %p80, %p81
      %s84 = sadd.s32 %s83, 1
      %p87 = scmp.eq.s32.totalorder %s14, 3
      %p88 = scmp.ne.s32.totalorder %s83, %s85
      %p89 = scmp.eq.s32.totalorder %s14, 0
      %p90 = por %p88, %p89
      %p91 = scmp.ne.s32.totalorder %s83, %s85
      %p92 = scmp.eq.s32.totalorder %s19, 3
      %p93 = por %p91, %p92
      %p94 = scmp.ne.s32.totalorder %s85, %s86
      %p95 = scmp.eq.s32.totalorder %s19, 0
      %p96 = por %p94, %p95
      %p97 = scmp.ne.s32.totalorder %s85, %s86
      %p98 = scmp.eq.s32.totalorder %s20, 3
      %p99 = por %p97, %p98
      %p101 = scmp.ne.s32.totalorder %s86, %s100
      %p102 = scmp.eq.s32.totalorder %s20, 0
      %p103 = por %p101, %p102
      %s105 = sadd.s32 %s104, 1
      %p108 = scmp.eq.s32.totalorder %s14, 3
      %p109 = scmp.ne.s32.totalorder %s104, %s106
      %p110 = scmp.eq.s32.totalorder %s14, 0
      %p111 = por %p109, %p110
      %p112 = scmp.ne.s32.totalorder %s104, %s106
      %p113 = scmp.eq.s32.totalorder %s19, 3
      %p114 = por %p112, %p113
      %p115 = scmp.ne.s32.totalorder %s106, %s107
      %p116 = scmp.eq.s32.totalorder %s19, 0
      %p117 = por %p115, %p116
      %p118 = scmp.ne.s32.totalorder %s106, %s107
      %p119 = scmp.eq.s32.totalorder %s20, 3
      %p120 = por %p118, %p119
      %p122 = scmp.ne.s32.totalorder %s107, %s121
      %p123 = scmp.eq.s32.totalorder %s20, 0
      %p124 = por %p122, %p123
      %s125 = ssub.s32 %s21, %s33
      %p126 = scmp.eq.s32.totalorder %s125, 0
      %s128 = sadd.s32 %s127, 1
      %s129 = scalar_select %p126, %s127, %s128
      %p132 = pneg %p126
      %p133 = scmp.eq.s32.totalorder %s14, 3
      %p134 = por %p132, %p133
      %p135 = scmp.ne.s32.totalorder %s127, %s130
      %p136 = scmp.eq.s32.totalorder %s14, 0
      %p137 = por %p135, %p136
      %p138 = scmp.ne.s32.totalorder %s127, %s130
      %p139 = scmp.eq.s32.totalorder %s19, 3
      %p140 = por %p138, %p139
      %p141 = scmp.ne.s32.totalorder %s130, %s131
      %p142 = scmp.eq.s32.totalorder %s19, 0
      %p143 = por %p141, %p142
      %p144 = scmp.ne.s32.totalorder %s130, %s131
      %p145 = scmp.eq.s32.totalorder %s20, 3
      %p146 = por %p144, %p145
      %p148 = scmp.ne.s32.totalorder %s131, %s147
      %p149 = scmp.eq.s32.totalorder %s20, 0
      %p150 = por %p148, %p149
      %s151 = ssub.s32 %s21, %s33
      %p152 = scmp.eq.s32.totalorder %s151, 0
      %s154 = sadd.s32 %s153, 1
      %s155 = scalar_select %p152, %s153, %s154
      %p158 = pneg %p152
      %p159 = scmp.eq.s32.totalorder %s14, 3
      %p160 = por %p158, %p159
      %p161 = scmp.ne.s32.totalorder %s153, %s156
      %p162 = scmp.eq.s32.totalorder %s14, 0
      %p163 = por %p161, %p162
      %p164 = scmp.ne.s32.totalorder %s153, %s156
      %p165 = scmp.eq.s32.totalorder %s19, 3
      %p166 = por %p164, %p165
      %p167 = scmp.ne.s32.totalorder %s156, %s157
      %p168 = scmp.eq.s32.totalorder %s19, 0
      %p169 = por %p167, %p168
      %p170 = scmp.ne.s32.totalorder %s156, %s157
      %p171 = scmp.eq.s32.totalorder %s20, 3
      %p172 = por %p170, %p171
      %p174 = scmp.ne.s32.totalorder %s157, %s173
      %p175 = scmp.eq.s32.totalorder %s20, 0
      %p176 = por %p174, %p175
      %s177 = ssub.s32 %s21, %s33
      %p178 = scmp.eq.s32.totalorder %s177, 0
      %s180 = sadd.s32 %s179, 1
      %s181 = scalar_select %p178, %s179, %s180
      %p184 = pneg %p178
      %p185 = scmp.eq.s32.totalorder %s14, 3
      %p186 = por %p184, %p185
      %p187 = scmp.ne.s32.totalorder %s179, %s182
      %p188 = scmp.eq.s32.totalorder %s14, 0
      %p189 = por %p187, %p188
      %p190 = scmp.ne.s32.totalorder %s179, %s182
      %p191 = scmp.eq.s32.totalorder %s19, 3
      %p192 = por %p190, %p191
      %p193 = scmp.ne.s32.totalorder %s182, %s183
      %p194 = scmp.eq.s32.totalorder %s19, 0
      %p195 = por %p193, %p194
      %p196 = scmp.ne.s32.totalorder %s182, %s183
      %p197 = scmp.eq.s32.totalorder %s20, 3
      %p198 = por %p196, %p197
      %p200 = scmp.ne.s32.totalorder %s183, %s199
      %p201 = scmp.eq.s32.totalorder %s20, 0
      %p202 = por %p200, %p201
      %p203 = scmp.le.s32.totalorder 1, %s14
      %p204 = scmp.lt.s32.totalorder %s14, 5
      %p205 = pnand %p203, %p204
      %p206 = pneg %p205
      // Predicated region
      $region9: #{fft_patch_embed.1} parent=5 // pred_check
        _
      $region10: #{fft_patch_embed.1} parent=5 // pred_check_branch
        %208 = sbr.rel (%p205) target = $region12
      $region11: #{fft_patch_embed.1} parent=5 // pred_region
        %s209 = ssub.s32 %s14, 1
        // Predicated region
        $region13: #{fft_patch_embed.1} parent=11 // pred_check
          %p210 = pneg %p75
        $region14: #{fft_patch_embed.1} parent=11 // pred_check_branch
          %212 = sbr.rel (%p210) target = $region16
        $region15: #{fft_patch_embed.1} parent=11 // pred_region
          _
        $region16: #{fft_patch_embed.1} parent=11 // pred_fallthru
          _
        // Predicated region
        $region17: #{fft_patch_embed.1} parent=11 // pred_check
          %p213 = pneg %p96
        $region18: #{fft_patch_embed.1} parent=11 // pred_check_branch
          %215 = sbr.rel (%p213) target = $region20
        $region19: #{fft_patch_embed.1} parent=11 // pred_region
          _
        $region20: #{fft_patch_embed.1} parent=11 // pred_fallthru
          _
        // Predicated region
        $region21: #{fft_patch_embed.1} parent=11 // pred_check
          %p216 = pneg %p117
        $region22: #{fft_patch_embed.1} parent=11 // pred_check_branch
          %218 = sbr.rel (%p216) target = $region24
        $region23: #{fft_patch_embed.1} parent=11 // pred_region
          _
        $region24: #{fft_patch_embed.1} parent=11 // pred_fallthru
          _
      $region12: #{fft_patch_embed.1} parent=5 // pred_fallthru
        _
      %p219 = scmp.lt.s32.totalorder %s14, 4
      // Predicated region
      $region25: #{fft_patch_embed.1} parent=5 // pred_check
        %p220 = pneg %p219
      $region26: #{fft_patch_embed.1} parent=5 // pred_check_branch
        %222 = sbr.rel (%p220) target = $region28
      $region27: #{fft_patch_embed.1} parent=5 // pred_region
        // Predicated region
        $region29: #{fft_patch_embed.1} parent=27 // pred_check
          %p223 = pneg %p48
        $region30: #{fft_patch_embed.1} parent=27 // pred_check_branch
          %225 = sbr.rel (%p223) target = $region32
        $region31: #{fft_patch_embed.1} parent=27 // pred_region
          %p226 = scmp.lt.s32.totalorder %s22, 3
          %s227 = scalar_select %p226, %s22, 3
          %p228 = scmp.lt.s32.totalorder %s21, 0
          %s229 = scalar_select %p228, %s21, 0
          %s230 = sadd.s32 %s229, %s227
          %s231 = smul.addr %s230, 8
          %s232 = scalar_lea.vmem %s0, %s231
        $region32: #{fft_patch_embed.1} parent=27 // pred_fallthru
          _
      $region28: #{fft_patch_embed.1} parent=5 // pred_fallthru
        _
      %p233 = scmp.le.s32.totalorder 1, %s14
      %p234 = scmp.lt.s32.totalorder %s14, 5
      %p235 = pnand %p233, %p234
      %p236 = pneg %p235
      // Predicated region
      $region33: #{fft_patch_embed.1} parent=5 // pred_check
        _
      $region34: #{fft_patch_embed.1} parent=5 // pred_check_branch
        %238 = sbr.rel (%p235) target = $region36
      $region35: #{fft_patch_embed.1} parent=5 // pred_region
        %s239 = ssub.s32 %s14, 1
        %p240 = scmp.lt.s32.totalorder %s24, 3
        %s241 = scalar_select %p240, %s24, 3
        %p242 = scmp.lt.s32.totalorder %s23, 0
        %s243 = scalar_select %p242, %s23, 0
        %s244 = sadd.s32 %s243, %s241
        %s245 = smul.addr %s244, 8
        %s246 = scalar_lea.vmem %s0, %s245
        %p247 = pneg %p54
        %p248 = pneg %p51
        %p249 = pneg %p75
        %p250 = pneg %p72
        %p251 = pneg %p96
        %p252 = pneg %p93
        %p253 = pneg %p117
        %p254 = pneg %p114
        %p255 = pneg %p143
        %p256 = pneg %p140
        %p257 = pneg %p169
        %p258 = pneg %p166
        %p259 = scmp.lt.s32.totalorder %s23, 0
        %s260 = scalar_select %p259, %s23, 0
        %s261 = smul.addr %s260, 8
        %s262 = scalar_lea.vmem %s5, %s261
        %p263 = pneg %p195
        %p264 = pneg %p192
        %p265 = scmp.lt.s32.totalorder %s23, 0
        %s266 = scalar_select %p265, %s23, 0
        %s267 = smul.addr %s266, 8
        %s268 = scalar_lea.vmem %s6, %s267
        %p269 = scmp.lt.s32.totalorder %s24, 3
        %s270 = scalar_select %p269, %s24, 3
        %p271 = scmp.lt.s32.totalorder %s23, 0
        %s272 = scalar_select %p271, %s23, 0
        %s273 = sadd.s32 %s272, %s270
        %s274 = smul.addr %s273, 8
        %s275 = scalar_lea.vmem %s0, %s274
        %p276 = scmp.lt.s32.totalorder %s23, 0
        %s277 = scalar_select %p276, %s23, 0
        %s278 = smul.addr %s277, 8
        %s279 = scalar_lea.vmem %s5, %s278
        %p280 = scmp.lt.s32.totalorder %s23, 0
        %s281 = scalar_select %p280, %s23, 0
        %s282 = smul.addr %s281, 8
        %s283 = scalar_lea.vmem %s6, %s282
        %p285 = scmp.eq.s32.totalorder %s24, 0
        // Predicated region
        $region37: #{fft_patch_embed.1} parent=35 // pred_check
          %p286 = pneg %p285
        $region38: #{fft_patch_embed.1} parent=35 // pred_check_branch
          %288 = sbr.rel (%p286) target = $region40
        $region39: #{fft_patch_embed.1} parent=35 // pred_region
          %289 = vst [vmem:[#allocation2] sm:$0xff] 0.0
          %290 = vst [vmem:[%s279] sm:$0xff] -inf
          %291 = vst [vmem:[%s283] sm:$0xff] 0.0
        $region40: #{fft_patch_embed.1} parent=35 // pred_fallthru
          _
        %v292 = vld [vmem:[%s275] sm:$0xff]
        %v293 = vld [vmem:[%s1] sm:$0xff]
        %v294 = vld [vmem:[%s1 + $0x8] sm:$0xff]
        %v295 = vld [vmem:[%s1 + $0x10] sm:$0xff]
        %v296 = vld [vmem:[%s1 + $0x18] sm:$0xff]
        %v297 = vld [vmem:[%s1 + $0x20] sm:$0xff]
        %v298 = vld [vmem:[%s1 + $0x28] sm:$0xff]
        %v299 = vld [vmem:[%s1 + $0x30] sm:$0xff]
        %v300 = vld [vmem:[%s1 + $0x38] sm:$0xff]
        %v301 = vld [vmem:[%s1 + $0x40] sm:$0xff]
        %v302 = vld [vmem:[%s1 + $0x48] sm:$0xff]
        %v303 = vld [vmem:[%s1 + $0x50] sm:$0xff]
        %v304 = vld [vmem:[%s1 + $0x58] sm:$0xff]
        %v305 = vld [vmem:[%s1 + $0x60] sm:$0xff]
        %v306 = vld [vmem:[%s1 + $0x68] sm:$0xff]
        %v307 = vld [vmem:[%s1 + $0x70] sm:$0xff]
        %v308 = vld [vmem:[%s1 + $0x78] sm:$0xff]
        %vm309 = vcmask 523264
        %v311 = vsel %vm309, %v292, 0
        %313 = vmatprep.subr.mxu0 0.0
        %314 = vmatpush1.msra.mxu0 0.0
        %315 = vmatprep.subr.mxu0 0.0
        %316 = vmatpush1.msra.mxu0 0.0
        %317 = vmatprep.subr.mxu0 0.0
        %318 = vmatpush1.msra.mxu0 0.0
        %319 = vmatprep.subr.mxu0 0.0
        %320 = vmatpush1.msra.mxu0 0.0
        %321 = vmatprep.subr.mxu0 0.0
        %322 = vmatpush1.msra.mxu0 0.0
        %323 = vmatprep.subr.mxu0 0.0
        %324 = vmatpush1.msra.mxu0 0.0
        %325 = vmatprep.subr.mxu0 0.0
        %326 = vmatpush1.msra.mxu0 0.0
        %327 = vmatprep.subr.mxu0 0.0
        %328 = vmatpush1.msra.mxu0 0.0
        %329 = vmatprep.subr.mxu0 %v308
        %330 = vmatpush1.msra.mxu0 %v307
        %331 = vmatprep.subr.mxu0 %v306
        %332 = vmatpush1.msra.mxu0 %v305
        %333 = vmatprep.subr.mxu0 %v304
        %334 = vmatpush1.msra.mxu0 %v303
        %335 = vmatprep.subr.mxu0 %v302
        %336 = vmatpush1.msra.mxu0 %v301
        %337 = vmatprep.subr.mxu0 %v300
        %338 = vmatpush1.msra.mxu0 %v299
        %339 = vmatprep.subr.mxu0 %v298
        %340 = vmatpush1.msra.mxu0 %v297
        %341 = vmatprep.subr.mxu0 %v296
        %342 = vmatpush1.msra.mxu0 %v295
        %343 = vmatprep.subr.mxu0 %v294
        %344 = vmatpush1.msra.mxu0 %v293
        %345 = vmatprep.subr.mxu0 0.0
        %346 = vmatpush2.msra.mxu0 0.0
        %347 = vmatprep.subr.mxu0 0.0
        %348 = vmatpush2.msra.mxu0 0.0
        %349 = vmatprep.subr.mxu0 0.0
        %350 = vmatpush2.msra.mxu0 0.0
        %351 = vmatprep.subr.mxu0 0.0
        %352 = vmatpush2.msra.mxu0 0.0
        %353 = vmatprep.subr.mxu0 0.0
        %354 = vmatpush2.msra.mxu0 0.0
        %355 = vmatprep.subr.mxu0 0.0
        %356 = vmatpush2.msra.mxu0 0.0
        %357 = vmatprep.subr.mxu0 0.0
        %358 = vmatpush2.msra.mxu0 0.0
        %359 = vmatprep.subr.mxu0 0.0
        %360 = vmatpush2.msra.mxu0 0.0
        %361 = vmatprep.subr.mxu0 0.0
        %362 = vmatpush2.msra.mxu0 0.0
        %363 = vmatprep.subr.mxu0 0.0
        %364 = vmatpush2.msra.mxu0 0.0
        %365 = vmatprep.subr.mxu0 0.0
        %366 = vmatpush2.msra.mxu0 0.0
        %367 = vmatprep.subr.mxu0 0.0
        %368 = vmatpush2.msra.mxu0 0.0
        %369 = vmatprep.subr.mxu0 0.0
        %370 = vmatpush2.msra.mxu0 0.0
        %371 = vmatprep.subr.mxu0 0.0
        %372 = vmatpush2.msra.mxu0 0.0
        %373 = vmatprep.subr.mxu0 0.0
        %374 = vmatpush2.msra.mxu0 0.0
        %375 = vmatprep.subr.mxu0 0.0
        %376 = vmatpush2.msra.mxu0 0.0
        %377 = vmatprep.mubr.f32.mxu0 0.0
        %378 = vmatmul.mubr.f32.gmra.mxu0 %v311
        %v379 = vpop.f32.mrf.mxu0
        %v380 = vadd.f32 0.0, %v379
        %v381 = vpop.f32.mrf.mxu0
        %v382 = vadd.f32 0.0, %v381
        %383 = vdwg.mxu0
        %v384 = vmul.f32 %v380, %v380
        %v385 = vmul.f32 %v382, %v382
        %v386 = vadd.f32 %v384, %v385
        %v387 = vlog2.pop %v386
        %v388 = vmul.f32 %v387, 0.6931472
        %v389 = vmul.f32 %v388, 0.5
        %v390 = vand.u32 2147483647, %v389
        %vm391 = vcmp.eq.f32.partialorder %v390, inf
        %v392 = vsel %vm391, 0.0, %v389
        %s393 = smul.u32 %s24, 16
        %s394 = smul.addr %s393, 4
        %s395 = scalar_lea.vmem %s2, %s394
        %v396 = vld [vmem:[%s395] sm:$0xf]
        %v397 = vld [vmem:[%s395 + $0x4] sm:$0xf]
        %v398 = vld [vmem:[%s395 + $0x8] sm:$0xf]
        %v399 = vld [vmem:[%s395 + $0xc] sm:$0xf]
        %v400 = vld [vmem:[%s395 + $0x10] sm:$0xf]
        %v401 = vld [vmem:[%s395 + $0x14] sm:$0xf]
        %v402 = vld [vmem:[%s395 + $0x18] sm:$0xf]
        %v403 = vld [vmem:[%s395 + $0x1c] sm:$0xf]
        %v404 = vld [vmem:[%s395 + $0x20] sm:$0xf]
        %v405 = vld [vmem:[%s395 + $0x24] sm:$0xf]
        %v406 = vld [vmem:[%s395 + $0x28] sm:$0xf]
        %v407 = vld [vmem:[%s395 + $0x2c] sm:$0xf]
        %v408 = vld [vmem:[%s395 + $0x30] sm:$0xf]
        %v409 = vld [vmem:[%s395 + $0x34] sm:$0xf]
        %v410 = vld [vmem:[%s395 + $0x38] sm:$0xf]
        %v411 = vld [vmem:[%s395 + $0x3c] sm:$0xf]
        %v412 = vld [vmem:[#allocation2] sm:$0xff]
        %v413 = vpack.c.bf16 %v392, %v392
        %v430 = vunpack.c.l.b16 %v396
        %v431 = vunpack.c.l.b16 %v397
        %v432 = vunpack.c.l.b16 %v398
        %v433 = vunpack.c.l.b16 %v399
        %v434 = vunpack.c.l.b16 %v400
        %v435 = vunpack.c.l.b16 %v401
        %v436 = vunpack.c.l.b16 %v402
        %v437 = vunpack.c.l.b16 %v403
        %v438 = vunpack.c.l.b16 %v404
        %v439 = vunpack.c.l.b16 %v405
        %v440 = vunpack.c.l.b16 %v406
        %v441 = vunpack.c.l.b16 %v407
        %v442 = vunpack.c.l.b16 %v408
        %v443 = vunpack.c.l.b16 %v409
        %v444 = vunpack.c.l.b16 %v410
        %v445 = vunpack.c.l.b16 %v411
        %v446 = vpack.c.b16 %v431, %v430
        %v447 = vpack.c.b16 %v433, %v432
        %v448 = vpack.c.b16 %v435, %v434
        %v449 = vpack.c.b16 %v437, %v436
        %v450 = vpack.c.b16 %v439, %v438
        %v451 = vpack.c.b16 %v441, %v440
        %v452 = vpack.c.b16 %v443, %v442
        %v453 = vpack.c.b16 %v445, %v444
        %462 = vmatprep.subr.bf16.mxu0 0
        %463 = vmatpush1.bf16.msra.mxu0 %v453
        %464 = vmatprep.subr.bf16.mxu0 0
        %465 = vmatpush1.bf16.msra.mxu0 %v452
        %466 = vmatprep.subr.bf16.mxu0 0
        %467 = vmatpush1.bf16.msra.mxu0 %v451
        %468 = vmatprep.subr.bf16.mxu0 0
        %469 = vmatpush1.bf16.msra.mxu0 %v450
        %470 = vmatprep.subr.bf16.mxu0 0
        %471 = vmatpush1.bf16.msra.mxu0 %v449
        %472 = vmatprep.subr.bf16.mxu0 0
        %473 = vmatpush1.bf16.msra.mxu0 %v448
        %474 = vmatprep.subr.bf16.mxu0 0
        %475 = vmatpush1.bf16.msra.mxu0 %v447
        %476 = vmatprep.subr.bf16.mxu0 0
        %477 = vmatpush1.bf16.msra.mxu0 %v446
        %478 = vmatprep.subr.bf16.mxu0 0
        %479 = vmatpush2.bf16.msra.mxu0 0
        %480 = vmatprep.subr.bf16.mxu0 0
        %481 = vmatpush2.bf16.msra.mxu0 0
        %482 = vmatprep.subr.bf16.mxu0 0
        %483 = vmatpush2.bf16.msra.mxu0 0
        %484 = vmatprep.subr.bf16.mxu0 0
        %485 = vmatpush2.bf16.msra.mxu0 0
        %486 = vmatprep.subr.bf16.mxu0 0
        %487 = vmatpush2.bf16.msra.mxu0 0
        %488 = vmatprep.subr.bf16.mxu0 0
        %489 = vmatpush2.bf16.msra.mxu0 0
        %490 = vmatprep.subr.bf16.mxu0 0
        %491 = vmatpush2.bf16.msra.mxu0 0
        %492 = vmatprep.subr.bf16.mxu0 0
        %493 = vmatpush2.bf16.msra.mxu0 0
        %494 = vmatprep.mubr.bf16.mxu0 0
        %495 = vmatmul.mubr.bf16.gmra.mxu0 %v413
        %v496 = vpop.f32.mrf.mxu0
        %v497 = vadd.f32 0.0, %v496
        %v498 = vpop.f32.mrf.mxu0
        %v499 = vpop.f32.mrf.mxu0
        %v500 = vpop.f32.mrf.mxu0
        %501 = vdwg.mxu0
        %v502 = vadd.f32 %v412, %v497
        %503 = vst [vmem:[#allocation2] sm:$0xff] %v502
        %v504 = vld [vmem:[%s279] sm:$0xff]
        %505 = vmax.xlane.f32.xlu0 %v389
        %v506 = vpop.xlane.xlu0 %505
        %v507 = vrot.slane %v506, 4
        %v508 = vmax.f32 %v506, %v507
        %v509 = vrot.slane %v508, 2
        %v510 = vmax.f32 %v508, %v509
        %v511 = vrot.slane %v510, 1
        %v512 = vmax.f32 %v510, %v511
        %s513 = vtos %v512
        %v514 = vstv %s513
        %v515 = vmax.f32 %v504, %v514
        %516 = vst [vmem:[%s279] sm:$0xff] %v515
        %v517 = vlaneseq
        %v518 = vand.u32 %v517, 127
        %vm519 = vcmp.lt.s32.totalorder %v518, 40
        %vm520 = vmand %vm391, %vm519
        %v521 = vsel %vm520, 1.0, 0.0
        %v522 = vld [vmem:[%s283] sm:$0xff]
        %523 = vmax.xlane.f32.xlu0 %v521
        %v524 = vpop.xlane.xlu0 %523
        %v525 = vrot.slane %v524, 4
        %v526 = vmax.f32 %v524, %v525
        %v527 = vrot.slane %v526, 2
        %v528 = vmax.f32 %v526, %v527
        %v529 = vrot.slane %v528, 1
        %v530 = vmax.f32 %v528, %v529
        %s531 = vtos %v530
        %v532 = vstv %s531
        %v533 = vmax.f32 %v522, %v532
        %534 = vst [vmem:[%s283] sm:$0xff] %v533
        %p535 = scmp.eq.s32.totalorder %s24, 3
        // Predicated region
        $region41: #{fft_patch_embed.1} parent=35 // pred_check
          %p536 = pneg %p535
        $region42: #{fft_patch_embed.1} parent=35 // pred_check_branch
          %538 = sbr.rel (%p536) target = $region44
        $region43: #{fft_patch_embed.1} parent=35 // pred_region
          %v539 = vld [vmem:[#allocation2] sm:$0xff]
          %v540 = vld [vmem:[%s3] sm:$0x1]
          %v542 = vlaneseq
          %v543 = vshrl.u32 %v542, 7
          %v544 = vsub.s32 0, %v543
          %v545 = vrot.slane %v540, %v544
          %v547 = vadd.f32 %v539, %v545
          %v548 = vand.u32 2147483647, %v547
          %549 = vst [vmem:[#allocation3] sm:$0xff] %v548
        $region44: #{fft_patch_embed.1} parent=35 // pred_fallthru
          _
        %p550 = scmp.lt.s32.totalorder %s23, 0
        %s551 = scalar_select %p550, %s23, 0
        %s552 = smul.addr %s551, 8
        %s553 = scalar_lea.vmem %s5, %s552
        %p554 = scmp.lt.s32.totalorder %s23, 0
        %s555 = scalar_select %p554, %s23, 0
        %s556 = smul.addr %s555, 8
        %s557 = scalar_lea.vmem %s6, %s556
        // Predicated region
        $region45: #{fft_patch_embed.1} parent=35 // pred_check
          %p558 = pneg %p140
        $region46: #{fft_patch_embed.1} parent=35 // pred_check_branch
          %560 = sbr.rel (%p558) target = $region48
        $region47: #{fft_patch_embed.1} parent=35 // pred_region
          %s562 = ssub.s32 128, 128
          %563 = vsyncadd [#allocation4], %s562
          %s564 = smul.addr %s23, 128
          %s565 = scalar_lea.hbm %s4, %s564
          %s567 = sshll.u32 [#allocation3], 4
          %s568 = int_to_ptr.vmem [resolvable:$true] %s567
          %570 = dma.vmem_to_hbm [thread:$0]  %s568, 128, %s565, [#allocation4]
        $region48: #{fft_patch_embed.1} parent=35 // pred_fallthru
          _
        // Predicated region
        $region49: #{fft_patch_embed.1} parent=35 // pred_check
          %p571 = pneg %p166
        $region50: #{fft_patch_embed.1} parent=35 // pred_check_branch
          %573 = sbr.rel (%p571) target = $region52
        $region51: #{fft_patch_embed.1} parent=35 // pred_region
          _
        $region52: #{fft_patch_embed.1} parent=35 // pred_fallthru
          _
        // Predicated region
        $region53: #{fft_patch_embed.1} parent=35 // pred_check
          %p574 = pneg %p192
        $region54: #{fft_patch_embed.1} parent=35 // pred_check_branch
          %576 = sbr.rel (%p574) target = $region56
        $region55: #{fft_patch_embed.1} parent=35 // pred_region
          _
        $region56: #{fft_patch_embed.1} parent=35 // pred_fallthru
          _
        // Predicated region
        $region57: #{fft_patch_embed.1} parent=35 // pred_check
          %p577 = pneg %p140
        $region58: #{fft_patch_embed.1} parent=35 // pred_check_branch
          %579 = sbr.rel (%p577) target = $region60
        $region59: #{fft_patch_embed.1} parent=35 // pred_region
          %580 = dma.done [#allocation4], 128
        $region60: #{fft_patch_embed.1} parent=35 // pred_fallthru
          _
        // Predicated region
        $region61: #{fft_patch_embed.1} parent=35 // pred_check
          %p581 = pneg %p166
        $region62: #{fft_patch_embed.1} parent=35 // pred_check_branch
          %583 = sbr.rel (%p581) target = $region64
        $region63: #{fft_patch_embed.1} parent=35 // pred_region
          %p584 = scmp.lt.s32.totalorder %s23, 0
          %s585 = scalar_select %p584, %s23, 0
          %s586 = smul.addr %s585, 8
          %s587 = scalar_lea.vmem %s5, %s586
        $region64: #{fft_patch_embed.1} parent=35 // pred_fallthru
          _
        // Predicated region
        $region65: #{fft_patch_embed.1} parent=35 // pred_check
          %p588 = pneg %p192
        $region66: #{fft_patch_embed.1} parent=35 // pred_check_branch
          %590 = sbr.rel (%p588) target = $region68
        $region67: #{fft_patch_embed.1} parent=35 // pred_region
          %p591 = scmp.lt.s32.totalorder %s23, 0
          %s592 = scalar_select %p591, %s23, 0
          %s593 = smul.addr %s592, 8
          %s594 = scalar_lea.vmem %s6, %s593
        $region68: #{fft_patch_embed.1} parent=35 // pred_fallthru
          _
      $region36: #{fft_patch_embed.1} parent=5 // pred_fallthru
        _
      %p595 = scmp.le.s32.totalorder 2, %s14
      // Predicated region
      $region69: #{fft_patch_embed.1} parent=5 // pred_check
        %p596 = pneg %p595
      $region70: #{fft_patch_embed.1} parent=5 // pred_check_branch
        %598 = sbr.rel (%p596) target = $region72
      $region71: #{fft_patch_embed.1} parent=5 // pred_region
        %s599 = ssub.s32 %s14, 2
      $region72: #{fft_patch_embed.1} parent=5 // pred_fallthru
        _
    $region6: #{fft_patch_embed.1} parent=1 // loop_footer
      %s18 = sadd.s32 1, %s14
    $region7: #{fft_patch_embed.1} parent=1 // loop_footer_branch
      %13 = sbr.rel target = $region3
    $region8: #{fft_patch_embed.1} parent=1 // loop_exit
      _
    %600 = vsyncpa [#allocation4], 1
    %s601 = scalar_lea.sflag [#allocation4], 1
    %602 = vsyncpa %s601, 1

</llo_original>
